<compile_context>
chip_gen: v7x
topology: tpu7x:2x2x1
jax: 0.10.0
libtpu: 0.0.40
codegen_flags: <defaults>
</compile_context>

<pallas_src>
import functools

import jax
import jax.numpy as jnp
import numpy as np
from jax import lax
from jax.experimental import pallas as pl
from jax.experimental.pallas import tpu as pltpu

HIDDEN = 256
LANES = 128
MAX_TILE_B = 512  # rows per grid step for large (training) batches; sweepable


def _round_up(x, m):
    return ((x + m - 1) // m) * m


def _pick_tile_b(batch, max_tile=MAX_TILE_B):
    """Adaptive batch tile.

    * batch <= 8: a single 8-row tile (minimum sublane granule) -- the small
      inference case never pays for a 256-row matmul.
    * otherwise: aim for >= 2 grid steps (engages both TensorCores on v7x via
      dimension_semantics=("parallel",); harmless on v5e/v6e), capped at
      MAX_TILE_B rows per step.
    """
    if batch <= 8:
        return 8
    return min(_round_up(pl.cdiv(batch, 2), 8), max_tile)


def actor_kernel(x_ref, w1_ref, b1_ref, w2_ref, b2_ref, w3_ref, b3_ref, o_ref):
    # Explicit full-f32 MXU contraction (don't rely on the backend's implicit
    # default, which may be single-pass bf16 and only pass 1e-5 by luck).
    dot = functools.partial(
        jnp.dot,
        preferred_element_type=jnp.float32,
        precision=lax.Precision.HIGHEST,
    )
    x = x_ref[...]
    # fc1 (K = state_size, tiny -> essentially free) + relu (VPU slot)
    h = jnp.maximum(dot(x, w1_ref[...]) + b1_ref[...], 0.0)
    # fc2 (K = 256) + relu
    h = jnp.maximum(dot(h, w2_ref[...]) + b2_ref[...], 0.0)
    # fc3 (lane-padded output; padded columns are tanh(0) = 0) + tanh (EUP slot)
    h = dot(h, w3_ref[...]) + b3_ref[...]
    o_ref[...] = jnp.tanh(h).astype(o_ref.dtype)


@functools.partial(jax.jit, static_argnames=("action_size", "tile_b"))
def actor_forward(state, padded_params, *, action_size, tile_b=None):
    """state: (B, state_size) f32; padded_params from prepare_actor_params()."""
    B, state_size = state.shape
    out_pad = padded_params["w3"].shape[1]
    if tile_b is None:
        tile_b = _pick_tile_b(B)
    grid = (pl.cdiv(B, tile_b),)  # ragged last block handled by Pallas

    out = pl.pallas_call(
        actor_kernel,
        out_shape=jax.ShapeDtypeStruct((B, out_pad), jnp.float32),
        grid_spec=pltpu.PrefetchScalarGridSpec(
            num_scalar_prefetch=0,
            grid=grid,
            in_specs=[
                pl.BlockSpec((tile_b, state_size), lambda i: (i, 0)),  # state tile
                pl.BlockSpec((state_size, HIDDEN), lambda i: (0, 0)),  # w1 (resident)
                pl.BlockSpec((1, HIDDEN), lambda i: (0, 0)),           # b1
                pl.BlockSpec((HIDDEN, HIDDEN), lambda i: (0, 0)),      # w2
                pl.BlockSpec((1, HIDDEN), lambda i: (0, 0)),           # b2
                pl.BlockSpec((HIDDEN, out_pad), lambda i: (0, 0)),     # w3 (lane-padded)
                pl.BlockSpec((1, out_pad), lambda i: (0, 0)),          # b3 (lane-padded)
            ],
            out_specs=pl.BlockSpec((tile_b, out_pad), lambda i: (i, 0)),
        ),
        compiler_params=pltpu.CompilerParams(
            # Batch axis is embarrassingly parallel -> megacore sharding on
            # v7x whenever grid >= 2 (guaranteed by _pick_tile_b for B > 8).
            dimension_semantics=("parallel",),
        ),
    )(
        state,
        padded_params["w1"], padded_params["b1"],
        padded_params["w2"], padded_params["b2"],
        padded_params["w3"], padded_params["b3"],
    )
    return out[:, :action_size]


def init_actor_params(key, state_size, action_size):
    """Deterministic init mirroring Actor.__init__ / reset_parameters.

    PyTorch nn.Linear weight is (out, in); hidden_init uses weight.size()[0]
    (= out_features) as fan_in, so lim = 1/sqrt(256) for fc1/fc2 and 0.001 for
    fc3 (matching the spec's uniform_(-0.001, 0.001)).  Biases keep PyTorch's
    default Linear init: U(-1/sqrt(in_features), 1/sqrt(in_features)).
    Weights are stored transposed (in, out) for the kernel.
    """
    k = jax.random.split(key, 6)
    lim12 = 1.0 / np.sqrt(HIDDEN)
    lim3 = 0.001
    b1_lim = 1.0 / np.sqrt(state_size)
    b2_lim = 1.0 / np.sqrt(HIDDEN)
    b3_lim = 1.0 / np.sqrt(HIDDEN)
    return {
        "w1": jax.random.uniform(k[0], (state_size, HIDDEN), jnp.float32, -lim12, lim12),
        "b1": jax.random.uniform(k[1], (1, HIDDEN), jnp.float32, -b1_lim, b1_lim),
        "w2": jax.random.uniform(k[2], (HIDDEN, HIDDEN), jnp.float32, -lim12, lim12),
        "b2": jax.random.uniform(k[3], (HIDDEN, HIDDEN // HIDDEN, HIDDEN)[2:], jnp.float32, -b2_lim, b2_lim).reshape(1, HIDDEN),
        "w3": jax.random.uniform(k[4], (HIDDEN, action_size), jnp.float32, -lim3, lim3),
        "b3": jax.random.uniform(k[5], (1, action_size), jnp.float32, -b3_lim, b3_lim),
    }


def prepare_actor_params(params):
    """One-time parameter prep (hoisted out of the per-call hot path):
    pad fc3 weight/bias to a multiple of 128 output lanes so kernel stores
    lower to full `vst` instead of masked partial stores."""
    action_size = params["w3"].shape[1]
    out_pad = _round_up(action_size, LANES)
    prepped = dict(params)
    prepped["w3"] = jnp.pad(params["w3"], ((0, 0), (0, out_pad - action_size)))
    prepped["b3"] = jnp.pad(params["b3"], ((0, 0), (0, out_pad - action_size)))
    return prepped


def actor_forward_ref(state, params):
    dot = functools.partial(jnp.dot, precision=lax.Precision.HIGHEST)
    h = jnp.maximum(dot(state, params["w1"]) + params["b1"], 0.0)
    h = jnp.maximum(dot(h, params["w2"]) + params["b2"], 0.0)
    return jnp.tanh(dot(h, params["w3"]) + params["b3"])


if __name__ == "__main__":
    key = jax.random.PRNGKey(0)
    k_param, k_state = jax.random.split(key)

    batch = 2
    state_size = 8
    action_size = 4

    params = init_actor_params(k_param, state_size, action_size)
    padded_params = prepare_actor_params(params)  # one-time, outside hot path
    state = jax.random.normal(k_state, (batch, state_size), jnp.float32)

    out = actor_forward(state, padded_params, action_size=action_size)
    out = jax.block_until_ready(out)

    ref = actor_forward_ref(state, params)
    np.testing.assert_allclose(np.asarray(out), np.asarray(ref), rtol=1e-5, atol=1e-5)

    assert out.shape == (batch, action_size)
    print("KERNEL_OK")
</pallas_src>

<mosaic_0001>
module attributes {stable_mosaic.version = 11 : i64} {
  func.func @actor_kernel(%arg0: i32, %arg1: memref<8x8xf32, #tpu.memory_space<vmem>>, %arg2: memref<8x256xf32, #tpu.memory_space<vmem>>, %arg3: memref<1x256xf32, #tpu.memory_space<vmem>>, %arg4: memref<256x256xf32, #tpu.memory_space<vmem>>, %arg5: memref<1x256xf32, #tpu.memory_space<vmem>>, %arg6: memref<256x128xf32, #tpu.memory_space<vmem>>, %arg7: memref<1x128xf32, #tpu.memory_space<vmem>>, %arg8: memref<8x128xf32, #tpu.memory_space<vmem>>) attributes {dimension_semantics = [#tpu.dimension_semantics<parallel>], iteration_bounds = array<i64: 1>, scalar_prefetch = 0 : i64, scratch_operands = 0 : i64, tpu.core_type = #tpu.core_type<tc>, window_params = [{transform_indices = @transform_0, window_bounds = array<i64: 8, 8>}, {pipeline_mode = #tpu.pipeline_mode<synchronous>, transform_indices = @transform_1, window_bounds = array<i64: 8, 256>}, {pipeline_mode = #tpu.pipeline_mode<synchronous>, transform_indices = @transform_2, window_bounds = array<i64: 1, 256>}, {pipeline_mode = #tpu.pipeline_mode<synchronous>, transform_indices = @transform_3, window_bounds = array<i64: 256, 256>}, {pipeline_mode = #tpu.pipeline_mode<synchronous>, transform_indices = @transform_4, window_bounds = array<i64: 1, 256>}, {pipeline_mode = #tpu.pipeline_mode<synchronous>, transform_indices = @transform_5, window_bounds = array<i64: 256, 128>}, {pipeline_mode = #tpu.pipeline_mode<synchronous>, transform_indices = @transform_6, window_bounds = array<i64: 1, 128>}, {transform_indices = @transform_7, window_bounds = array<i64: 8, 128>}]} {
    %c0 = arith.constant 0 : index
    %c0_0 = arith.constant 0 : index
    %0 = vector.load %arg1[%c0, %c0_0] : memref<8x8xf32, #tpu.memory_space<vmem>>, vector<8x8xf32>
    %c0_1 = arith.constant 0 : index
    %c0_2 = arith.constant 0 : index
    %1 = vector.load %arg2[%c0_1, %c0_2] : memref<8x256xf32, #tpu.memory_space<vmem>>, vector<8x256xf32>
    %cst = arith.constant dense<0.000000e+00> : vector<8x256xf32>
    %2 = tpu.matmul %0, %1, %cst {dimension_numbers = #tpu.dot_dimension_numbers<[1], [0], [0], [1], [0, 0, 1, 1], [], []>, precision = #tpu.contract_precision<fp32>} : vector<8x8xf32>, vector<8x256xf32>, vector<8x256xf32> -> vector<8x256xf32>
    %c0_3 = arith.constant 0 : index
    %c0_4 = arith.constant 0 : index
    %3 = vector.load %arg3[%c0_3, %c0_4] : memref<1x256xf32, #tpu.memory_space<vmem>>, vector<1x256xf32>
    %4 = vector.broadcast %3 : vector<1x256xf32> to vector<8x256xf32>
    %5 = arith.addf %2, %4 : vector<8x256xf32>
    %cst_5 = arith.constant 0.000000e+00 : f32
    %6 = vector.broadcast %cst_5 : f32 to vector<8x256xf32>
    %7 = arith.maximumf %5, %6 : vector<8x256xf32>
    %c0_6 = arith.constant 0 : index
    %c0_7 = arith.constant 0 : index
    %8 = vector.load %arg4[%c0_6, %c0_7] : memref<256x256xf32, #tpu.memory_space<vmem>>, vector<256x256xf32>
    %cst_8 = arith.constant dense<0.000000e+00> : vector<8x256xf32>
    %9 = tpu.matmul %7, %8, %cst_8 {dimension_numbers = #tpu.dot_dimension_numbers<[1], [0], [0], [1], [0, 0, 1, 1], [], []>, precision = #tpu.contract_precision<fp32>} : vector<8x256xf32>, vector<256x256xf32>, vector<8x256xf32> -> vector<8x256xf32>
    %c0_9 = arith.constant 0 : index
    %c0_10 = arith.constant 0 : index
    %10 = vector.load %arg5[%c0_9, %c0_10] : memref<1x256xf32, #tpu.memory_space<vmem>>, vector<1x256xf32>
    %11 = vector.broadcast %10 : vector<1x256xf32> to vector<8x256xf32>
    %12 = arith.addf %9, %11 : vector<8x256xf32>
    %cst_11 = arith.constant 0.000000e+00 : f32
    %13 = vector.broadcast %cst_11 : f32 to vector<8x256xf32>
    %14 = arith.maximumf %12, %13 : vector<8x256xf32>
    %c0_12 = arith.constant 0 : index
    %c0_13 = arith.constant 0 : index
    %15 = vector.load %arg6[%c0_12, %c0_13] : memref<256x128xf32, #tpu.memory_space<vmem>>, vector<256x128xf32>
    %cst_14 = arith.constant dense<0.000000e+00> : vector<8x128xf32>
    %16 = tpu.matmul %14, %15, %cst_14 {dimension_numbers = #tpu.dot_dimension_numbers<[1], [0], [0], [1], [0, 0, 1, 1], [], []>, precision = #tpu.contract_precision<fp32>} : vector<8x256xf32>, vector<256x128xf32>, vector<8x128xf32> -> vector<8x128xf32>
    %c0_15 = arith.constant 0 : index
    %c0_16 = arith.constant 0 : index
    %17 = vector.load %arg7[%c0_15, %c0_16] : memref<1x128xf32, #tpu.memory_space<vmem>>, vector<1x128xf32>
    %18 = vector.broadcast %17 : vector<1x128xf32> to vector<8x128xf32>
    %19 = arith.addf %16, %18 : vector<8x128xf32>
    %20 = math.tanh %19 : vector<8x128xf32>
    %c0_17 = arith.constant 0 : index
    %c0_18 = arith.constant 0 : index
    %21 = vector.load %arg8[%c0_17, %c0_18] : memref<8x128xf32, #tpu.memory_space<vmem>>, vector<8x128xf32>
    tpu.vector_store %arg8[%c0_17, %c0_18], %20 {strides = array<i32>} : memref<8x128xf32, #tpu.memory_space<vmem>>, vector<8x128xf32>,
    return
  }
  func.func @transform_0(%arg0: i32) -> (i32, i32) {
    %c0_i32 = arith.constant 0 : i32
    %c0_i32_0 = arith.constant 0 : i32
    return %arg0, %c0_i32 : i32, i32
  }
  func.func @transform_1(%arg0: i32) -> (i32, i32) {
    %c0_i32 = arith.constant 0 : i32
    %c0_i32_0 = arith.constant 0 : i32
    %c0_i32_1 = arith.constant 0 : i32
    return %c0_i32, %c0_i32_0 : i32, i32
  }
  func.func @transform_2(%arg0: i32) -> (i32, i32) {
    %c0_i32 = arith.constant 0 : i32
    %c0_i32_0 = arith.constant 0 : i32
    %c0_i32_1 = arith.constant 0 : i32
    return %c0_i32, %c0_i32_0 : i32, i32
  }
  func.func @transform_3(%arg0: i32) -> (i32, i32) {
    %c0_i32 = arith.constant 0 : i32
    %c0_i32_0 = arith.constant 0 : i32
    %c0_i32_1 = arith.constant 0 : i32
    return %c0_i32, %c0_i32_0 : i32, i32
  }
  func.func @transform_4(%arg0: i32) -> (i32, i32) {
    %c0_i32 = arith.constant 0 : i32
    %c0_i32_0 = arith.constant 0 : i32
    %c0_i32_1 = arith.constant 0 : i32
    return %c0_i32, %c0_i32_0 : i32, i32
  }
  func.func @transform_5(%arg0: i32) -> (i32, i32) {
    %c0_i32 = arith.constant 0 : i32
    %c0_i32_0 = arith.constant 0 : i32
    %c0_i32_1 = arith.constant 0 : i32
    return %c0_i32, %c0_i32_0 : i32, i32
  }
  func.func @transform_6(%arg0: i32) -> (i32, i32) {
    %c0_i32 = arith.constant 0 : i32
    %c0_i32_0 = arith.constant 0 : i32
    %c0_i32_1 = arith.constant 0 : i32
    return %c0_i32, %c0_i32_0 : i32, i32
  }
  func.func @transform_7(%arg0: i32) -> (i32, i32) {
    %c0_i32 = arith.constant 0 : i32
    %c0_i32_0 = arith.constant 0 : i32
    return %arg0, %c0_i32 : i32, i32
  }
}

</mosaic_0001>

<llo_original>
// kernel: actor_forward.1
$region0: #{actor_forward.1}
  #allocation0 [shape = 'u32[]', space=smem, size = 0x4, offset = 0x4, fixed_abs, tag = 'smem constant byte address 0x4 - core index']
  #allocation1 [shape = 'u32[144,128]{1,0:T(1,128)}', space=vmem, size = 0x12000, scoped, tag = 'internal scratch']
  %s0 = inlined_call_operand.hbm [shape: f32[2,8], index: 0, kind: input, shape index: {}]
  %s1 = inlined_call_operand.hbm [shape: f32[8,256], index: 1, kind: input, shape index: {}]
  %s2 = inlined_call_operand.vmem [shape: f32[1,256], index: 2, kind: input, shape index: {}]
  %s3 = inlined_call_operand.hbm [shape: f32[256,256], index: 3, kind: input, shape index: {}]
  %s4 = inlined_call_operand.vmem [shape: f32[1,256], index: 4, kind: input, shape index: {}]
  %s5 = inlined_call_operand.hbm [shape: f32[256,128], index: 5, kind: input, shape index: {}]
  %s6 = inlined_call_operand.vmem [shape: f32[1,128], index: 6, kind: input, shape index: {}]
  %s7 = inlined_call_operand.hbm [shape: f32[2,128], index: 7, kind: output, shape index: {}]
  %s8 = sld [smem:[#allocation0]]
  $region54: #{actor_forward.1} parent=0
    _
  %s10 = ssub.s32 1, %s8
  %s11 = scalar_select 0, %s10, %s8
  $region1: #{actor_forward.1} parent=0
    #allocation2 [shape = 'u8[4096]{0}', space=vmem, size = 0x1000, scoped, tag = 'input window, operand 0, single buffered']
    #allocation3 [shape = 's32[1]{0}', space=sflag, size = 0x4, scoped, tag = 'scoped memory for actor_forward.1']
    #allocation4 [shape = 's32[1]{0}', space=sflag, size = 0x4, scoped, tag = 'scoped memory for actor_forward.1']
    #allocation5 [shape = 'u8[8192]{0}', space=vmem, size = 0x2000, scoped, tag = 'input window, operand 1, single buffered']
    #allocation6 [shape = 's32[1]{0}', space=sflag, size = 0x4, scoped, tag = 'scoped memory for actor_forward.1']
    #allocation7 [shape = 'u8[262144]{0}', space=vmem, size = 0x40000, scoped, tag = 'input window, operand 3, single buffered']
    #allocation8 [shape = 'u8[131072]{0}', space=vmem, size = 0x20000, scoped, tag = 'input window, operand 5, single buffered']
    #allocation9 [shape = 's32[1]{0}', space=sflag, size = 0x4, scoped, tag = 'scoped memory for actor_forward.1']
    #allocation10 [shape = 'u8[4096]{0}', space=vmem, size = 0x1000, scoped, tag = 'output window, operand 0, single buffered']
    %12 = vsyncpa [#allocation3], 0
    %13 = vsyncpa [#allocation6], 0
    %14 = vsyncpa [#allocation9], 0
    %15 = vsyncpa [#allocation4], 0
    // Predicated region
    $region2: #{actor_forward.1} parent=1 // pred_check
      _
    $region3: #{actor_forward.1} parent=1 // pred_check_branch
      %17 = sbr.rel (0) target = $region5
    $region4: #{actor_forward.1} parent=1 // pred_region
      %s19 = ssub.s32 128, 32
      %20 = vsyncadd [#allocation3], %s19
      %s21 = sshll.u32 [#allocation2], 4
      %s22 = int_to_ptr.vmem [resolvable:$true] %s21
      %27 = dma.hbm_to_vmem [thread:$0]  %s0, 32, %s22, [#allocation3], 32, 32, 2
    $region5: #{actor_forward.1} parent=1 // pred_fallthru
      _
    // Predicated region
    $region6: #{actor_forward.1} parent=1 // pred_check
      _
    $region7: #{actor_forward.1} parent=1 // pred_check_branch
      %29 = sbr.rel (0) target = $region9
    $region8: #{actor_forward.1} parent=1 // pred_region
      %s31 = ssub.s32 256, 256
      %32 = vsyncadd [#allocation6], %s31
      %s34 = sshll.u32 [#allocation5], 4
      %s35 = int_to_ptr.vmem [resolvable:$true] %s34
      %37 = dma.hbm_to_vmem [thread:$0]  %s1, 256, %s35, [#allocation6]
    $region9: #{actor_forward.1} parent=1 // pred_fallthru
      _
    // Predicated region
    $region10: #{actor_forward.1} parent=1 // pred_check
      _
    $region11: #{actor_forward.1} parent=1 // pred_check_branch
      %39 = sbr.rel (0) target = $region13
    $region12: #{actor_forward.1} parent=1 // pred_region
      _
    $region13: #{actor_forward.1} parent=1 // pred_fallthru
      _
    // Predicated region
    $region14: #{actor_forward.1} parent=1 // pred_check
      _
    $region15: #{actor_forward.1} parent=1 // pred_check_branch
      %41 = sbr.rel (0) target = $region17
    $region16: #{actor_forward.1} parent=1 // pred_region
      %s43 = ssub.s32 8192, 8192
      %44 = vsyncadd [#allocation6], %s43
      %s45 = sshll.u32 [#allocation7], 4
      %s46 = int_to_ptr.vmem [resolvable:$true] %s45
      %51 = dma.hbm_to_vmem [thread:$0]  %s3, 8192, %s46, [#allocation6], 256, 256, 16
    $region17: #{actor_forward.1} parent=1 // pred_fallthru
      _
    // Predicated region
    $region18: #{actor_forward.1} parent=1 // pred_check
      _
    $region19: #{actor_forward.1} parent=1 // pred_check_branch
      %53 = sbr.rel (0) target = $region21
    $region20: #{actor_forward.1} parent=1 // pred_region
      _
    $region21: #{actor_forward.1} parent=1 // pred_fallthru
      _
    // Predicated region
    $region22: #{actor_forward.1} parent=1 // pred_check
      _
    $region23: #{actor_forward.1} parent=1 // pred_check_branch
      %55 = sbr.rel (0) target = $region25
    $region24: #{actor_forward.1} parent=1 // pred_region
      %s57 = ssub.s32 4096, 4096
      %58 = vsyncadd [#allocation9], %s57
      %s59 = sshll.u32 [#allocation8], 4
      %s60 = int_to_ptr.vmem [resolvable:$true] %s59
      %65 = dma.hbm_to_vmem [thread:$0]  %s5, 4096, %s60, [#allocation9], 128, 128, 8
    $region25: #{actor_forward.1} parent=1 // pred_fallthru
      _
    // Predicated region
    $region26: #{actor_forward.1} parent=1 // pred_check
      _
    $region27: #{actor_forward.1} parent=1 // pred_check_branch
      %67 = sbr.rel (0) target = $region29
    $region28: #{actor_forward.1} parent=1 // pred_region
      _
    $region29: #{actor_forward.1} parent=1 // pred_fallthru
      _
    // Predicated region
    $region30: #{actor_forward.1} parent=1 // pred_check
      _
    $region31: #{actor_forward.1} parent=1 // pred_check_branch
      %69 = sbr.rel (0) target = $region33
    $region32: #{actor_forward.1} parent=1 // pred_region
      %70 = dma.done [#allocation3], 128
    $region33: #{actor_forward.1} parent=1 // pred_fallthru
      _
    // Predicated region
    $region34: #{actor_forward.1} parent=1 // pred_check
      _
    $region35: #{actor_forward.1} parent=1 // pred_check_branch
      %72 = sbr.rel (0) target = $region37
    $region36: #{actor_forward.1} parent=1 // pred_region
      %73 = dma.done [#allocation6], 256
    $region37: #{actor_forward.1} parent=1 // pred_fallthru
      _
    // Predicated region
    $region38: #{actor_forward.1} parent=1 // pred_check
      _
    $region39: #{actor_forward.1} parent=1 // pred_check_branch
      %75 = sbr.rel (0) target = $region41
    $region40: #{actor_forward.1} parent=1 // pred_region
      %76 = dma.done [#allocation6], 8192
    $region41: #{actor_forward.1} parent=1 // pred_fallthru
      _
    // Predicated region
    $region42: #{actor_forward.1} parent=1 // pred_check
      _
    $region43: #{actor_forward.1} parent=1 // pred_check_branch
      %78 = sbr.rel (0) target = $region45
    $region44: #{actor_forward.1} parent=1 // pred_region
      %79 = dma.done [#allocation9], 4096
    $region45: #{actor_forward.1} parent=1 // pred_fallthru
      _
    %v80 = vld [vmem:[#allocation2] sm:$0xff]
    %v81 = vld [vmem:[#allocation5] sm:$0xff]
    %v82 = vld [vmem:[#allocation5 + $0x8] sm:$0xff]
    %v83 = vld [vmem:[%s2] sm:$0x3]
    %v85 = vlaneseq
    %v86 = vshrl.u32 %v85, 7
    %v87 = vsub.s32 0, %v86
    %v88 = vrot.slane %v83, %v87
    %v89 = vlaneseq
    %v90 = vshrl.u32 %v89, 7
    %v91 = vsub.s32 1, %v90
    %v92 = vrot.slane %v83, %v91
    %vm95 = vcmask 64512
    %v97 = vsel %vm95, %v80, 0
    %v99 = vand.u32 %v82, 4294901760
    %100 = vmatprep.subr.mxu0 %v99
    %v101 = vand.u32 %v81, 4294901760
    %102 = vmatpush1.msra.mxu0 %v101
    %103 = vmatprep.subr.mxu0 0.0
    %104 = vmatpush1.msra.mxu0 0.0
    %105 = vmatprep.subr.mxu0 0.0
    %106 = vmatpush1.msra.mxu0 0.0
    %107 = vmatprep.subr.mxu0 0.0
    %108 = vmatpush1.msra.mxu0 0.0
    %109 = vmatprep.subr.mxu0 0.0
    %110 = vmatpush1.msra.mxu0 0.0
    %111 = vmatprep.subr.mxu0 0.0
    %112 = vmatpush1.msra.mxu0 0.0
    %113 = vmatprep.subr.mxu0 0.0
    %114 = vmatpush1.msra.mxu0 0.0
    %115 = vmatprep.subr.mxu0 0.0
    %116 = vmatpush1.msra.mxu0 0.0
    %117 = vmatprep.subr.mxu0 0.0
    %118 = vmatpush1.msra.mxu0 0.0
    %119 = vmatprep.subr.mxu0 0.0
    %120 = vmatpush1.msra.mxu0 0.0
    %121 = vmatprep.subr.mxu0 0.0
    %122 = vmatpush1.msra.mxu0 0.0
    %123 = vmatprep.subr.mxu0 0.0
    %124 = vmatpush1.msra.mxu0 0.0
    %125 = vmatprep.subr.mxu0 0.0
    %126 = vmatpush1.msra.mxu0 0.0
    %127 = vmatprep.subr.mxu0 0.0
    %128 = vmatpush1.msra.mxu0 0.0
    %129 = vmatprep.subr.mxu0 0.0
    %130 = vmatpush1.msra.mxu0 0.0
    %131 = vmatprep.subr.mxu0 0.0
    %132 = vmatpush1.msra.mxu0 0.0
    %133 = vmatprep.subr.mxu0 0.0
    %134 = vmatpush1.msra.mxu0 0.0
    %135 = vmatprep.subr.mxu0 0.0
    %136 = vmatpush1.msra.mxu0 0.0
    %137 = vmatprep.subr.mxu0 0.0
    %138 = vmatpush1.msra.mxu0 0.0
    %139 = vmatprep.subr.mxu0 0.0
    %140 = vmatpush1.msra.mxu0 0.0
    %141 = vmatprep.subr.mxu0 0.0
    %142 = vmatpush1.msra.mxu0 0.0
    %143 = vmatprep.subr.mxu0 0.0
    %144 = vmatpush1.msra.mxu0 0.0
    %145 = vmatprep.subr.mxu0 0.0
    %146 = vmatpush1.msra.mxu0 0.0
    %147 = vmatprep.subr.mxu0 0.0
    %148 = vmatpush1.msra.mxu0 0.0
    %149 = vmatprep.subr.mxu0 0.0
    %150 = vmatpush1.msra.mxu0 0.0
    %151 = vmatprep.subr.mxu0 0.0
    %152 = vmatpush1.msra.mxu0 0.0
    %153 = vmatprep.subr.mxu0 0.0
    %154 = vmatpush1.msra.mxu0 0.0
    %155 = vmatprep.subr.mxu0 0.0
    %156 = vmatpush1.msra.mxu0 0.0
    %157 = vmatprep.subr.mxu0 0.0
    %158 = vmatpush1.msra.mxu0 0.0
    %159 = vmatprep.subr.mxu0 0.0
    %160 = vmatpush1.msra.mxu0 0.0
    %161 = vmatprep.subr.mxu0 0.0
    %162 = vmatpush1.msra.mxu0 0.0
    %163 = vmatprep.subr.mxu0 0.0
    %164 = vmatpush1.msra.mxu0 0.0
    %165 = vmatprep.mubr.f32.mxu0 0.0
    %v166 = vand.u32 %v97, 4294901760
    %v167 = vsub.f32 %v97, %v166
    %v168 = vand.u32 %v167, 4294901760
    %v169 = vsub.f32 %v167, %v168
    %v170 = vand.u32 %v169, 4294901760
    %171 = vmatmul.mubr.f32.gmra.mrb[0].mxu0 %v170
    %v172 = vpop.f32.mrb[0].mxu0
    %v173 = vadd.f32 %v88, %v172
    %v174 = vpop.f32.mrb[0].mxu0
    %v175 = vadd.f32 %v92, %v174
    %176 = vdwg.mxu0
    %v177 = vand.u32 %v82, 4294901760
    %v178 = vsub.f32 %v82, %v177
    %v179 = vand.u32 %v178, 4294901760
    %v180 = vsub.f32 %v178, %v179
    %v181 = vand.u32 %v180, 4294901760
    %182 = vmatprep.subr.mxu0 %v181
    %v183 = vand.u32 %v81, 4294901760
    %v184 = vsub.f32 %v81, %v183
    %v185 = vand.u32 %v184, 4294901760
    %v186 = vsub.f32 %v184, %v185
    %v187 = vand.u32 %v186, 4294901760
    %188 = vmatpush1.msra.mxu0 %v187
    %189 = vmatprep.subr.mxu0 0.0
    %190 = vmatpush1.msra.mxu0 0.0
    %191 = vmatprep.subr.mxu0 0.0
    %192 = vmatpush1.msra.mxu0 0.0
    %193 = vmatprep.subr.mxu0 0.0
    %194 = vmatpush1.msra.mxu0 0.0
    %195 = vmatprep.subr.mxu0 0.0
    %196 = vmatpush1.msra.mxu0 0.0
    %197 = vmatprep.subr.mxu0 0.0
    %198 = vmatpush1.msra.mxu0 0.0
    %199 = vmatprep.subr.mxu0 0.0
    %200 = vmatpush1.msra.mxu0 0.0
    %201 = vmatprep.subr.mxu0 0.0
    %202 = vmatpush1.msra.mxu0 0.0
    %203 = vmatprep.subr.mxu0 0.0
    %204 = vmatpush1.msra.mxu0 0.0
    %205 = vmatprep.subr.mxu0 0.0
    %206 = vmatpush1.msra.mxu0 0.0
    %207 = vmatprep.subr.mxu0 0.0
    %208 = vmatpush1.msra.mxu0 0.0
    %209 = vmatprep.subr.mxu0 0.0
    %210 = vmatpush1.msra.mxu0 0.0
    %211 = vmatprep.subr.mxu0 0.0
    %212 = vmatpush1.msra.mxu0 0.0
    %213 = vmatprep.subr.mxu0 0.0
    %214 = vmatpush1.msra.mxu0 0.0
    %215 = vmatprep.subr.mxu0 0.0
    %216 = vmatpush1.msra.mxu0 0.0
    %217 = vmatprep.subr.mxu0 0.0
    %218 = vmatpush1.msra.mxu0 0.0
    %219 = vmatprep.subr.mxu0 0.0
    %220 = vmatpush1.msra.mxu0 0.0
    %221 = vmatprep.subr.mxu0 0.0
    %222 = vmatpush1.msra.mxu0 0.0
    %223 = vmatprep.subr.mxu0 0.0
    %224 = vmatpush1.msra.mxu0 0.0
    %225 = vmatprep.subr.mxu0 0.0
    %226 = vmatpush1.msra.mxu0 0.0
    %227 = vmatprep.subr.mxu0 0.0
    %228 = vmatpush1.msra.mxu0 0.0
    %229 = vmatprep.subr.mxu0 0.0
    %230 = vmatpush1.msra.mxu0 0.0
    %231 = vmatprep.subr.mxu0 0.0
    %232 = vmatpush1.msra.mxu0 0.0
    %233 = vmatprep.subr.mxu0 0.0
    %234 = vmatpush1.msra.mxu0 0.0
    %235 = vmatprep.subr.mxu0 0.0
    %236 = vmatpush1.msra.mxu0 0.0
    %237 = vmatprep.subr.mxu0 0.0
    %238 = vmatpush1.msra.mxu0 0.0
    %239 = vmatprep.subr.mxu0 0.0
    %240 = vmatpush1.msra.mxu0 0.0
    %241 = vmatprep.subr.mxu0 0.0
    %242 = vmatpush1.msra.mxu0 0.0
    %243 = vmatprep.subr.mxu0 0.0
    %244 = vmatpush1.msra.mxu0 0.0
    %245 = vmatprep.subr.mxu0 0.0
    %246 = vmatpush1.msra.mxu0 0.0
    %247 = vmatprep.subr.mxu0 0.0
    %248 = vmatpush1.msra.mxu0 0.0
    %249 = vmatprep.subr.mxu0 0.0
    %250 = vmatpush1.msra.mxu0 0.0
    %251 = vmatprep.mubr.f32.mxu0 0.0
    %v252 = vand.u32 %v97, 4294901760
    %253 = vmatmul.mubr.f32.gmra.mrb[0].mxu0 %v252
    %v254 = vpop.f32.mrb[0].mxu0
    %v255 = vadd.f32 %v173, %v254
    %v256 = vpop.f32.mrb[0].mxu0
    %v257 = vadd.f32 %v175, %v256
    %258 = vdwg.mxu0
    %v259 = vand.u32 %v82, 4294901760
    %v260 = vsub.f32 %v82, %v259
    %261 = vmatprep.subr.mxu0 %v260
    %v262 = vand.u32 %v81, 4294901760
    %v263 = vsub.f32 %v81, %v262
    %264 = vmatpush1.msra.mxu0 %v263
    %265 = vmatprep.subr.mxu0 0.0
    %266 = vmatpush1.msra.mxu0 0.0
    %267 = vmatprep.subr.mxu0 0.0
    %268 = vmatpush1.msra.mxu0 0.0
    %269 = vmatprep.subr.mxu0 0.0
    %270 = vmatpush1.msra.mxu0 0.0
    %271 = vmatprep.subr.mxu0 0.0
    %272 = vmatpush1.msra.mxu0 0.0
    %273 = vmatprep.subr.mxu0 0.0
    %274 = vmatpush1.msra.mxu0 0.0
    %275 = vmatprep.subr.mxu0 0.0
    %276 = vmatpush1.msra.mxu0 0.0
    %277 = vmatprep.subr.mxu0 0.0
    %278 = vmatpush1.msra.mxu0 0.0
    %279 = vmatprep.subr.mxu0 0.0
    %280 = vmatpush1.msra.mxu0 0.0
    %281 = vmatprep.subr.mxu0 0.0
    %282 = vmatpush1.msra.mxu0 0.0
    %283 = vmatprep.subr.mxu0 0.0
    %284 = vmatpush1.msra.mxu0 0.0
    %285 = vmatprep.subr.mxu0 0.0
    %286 = vmatpush1.msra.mxu0 0.0
    %287 = vmatprep.subr.mxu0 0.0
    %288 = vmatpush1.msra.mxu0 0.0
    %289 = vmatprep.subr.mxu0 0.0
    %290 = vmatpush1.msra.mxu0 0.0
    %291 = vmatprep.subr.mxu0 0.0
    %292 = vmatpush1.msra.mxu0 0.0
    %293 = vmatprep.subr.mxu0 0.0
    %294 = vmatpush1.msra.mxu0 0.0
    %295 = vmatprep.subr.mxu0 0.0
    %296 = vmatpush1.msra.mxu0 0.0
    %297 = vmatprep.subr.mxu0 0.0
    %298 = vmatpush1.msra.mxu0 0.0
    %299 = vmatprep.subr.mxu0 0.0
    %300 = vmatpush1.msra.mxu0 0.0
    %301 = vmatprep.subr.mxu0 0.0
    %302 = vmatpush1.msra.mxu0 0.0
    %303 = vmatprep.subr.mxu0 0.0
    %304 = vmatpush1.msra.mxu0 0.0
    %305 = vmatprep.subr.mxu0 0.0
    %306 = vmatpush1.msra.mxu0 0.0
    %307 = vmatprep.subr.mxu0 0.0
    %308 = vmatpush1.msra.mxu0 0.0
    %309 = vmatprep.subr.mxu0 0.0
    %310 = vmatpush1.msra.mxu0 0.0
    %311 = vmatprep.subr.mxu0 0.0
    %312 = vmatpush1.msra.mxu0 0.0
    %313 = vmatprep.subr.mxu0 0.0
    %314 = vmatpush1.msra.mxu0 0.0
    %315 = vmatprep.subr.mxu0 0.0
    %316 = vmatpush1.msra.mxu0 0.0
    %317 = vmatprep.subr.mxu0 0.0
    %318 = vmatpush1.msra.mxu0 0.0
    %319 = vmatprep.subr.mxu0 0.0
    %320 = vmatpush1.msra.mxu0 0.0
    %321 = vmatprep.subr.mxu0 0.0
    %322 = vmatpush1.msra.mxu0 0.0
    %323 = vmatprep.subr.mxu0 0.0
    %324 = vmatpush1.msra.mxu0 0.0
    %325 = vmatprep.subr.mxu0 0.0
    %326 = vmatpush1.msra.mxu0 0.0
    %327 = vmatprep.mubr.f32.mxu0 0.0
    %v328 = vand.u32 %v97, 4294901760
    %v329 = vsub.f32 %v97, %v328
    %330 = vmatmul.mubr.f32.gmra.mrb[0].mxu0 %v329
    %v331 = vpop.f32.mrb[0].mxu0
    %v332 = vadd.f32 %v255, %v331
    %v333 = vpop.f32.mrb[0].mxu0
    %v334 = vadd.f32 %v257, %v333
    %335 = vdwg.mxu0
    %v336 = vand.u32 %v82, 4294901760
    %337 = vmatprep.subr.mxu0 %v336
    %v338 = vand.u32 %v81, 4294901760
    %339 = vmatpush1.msra.mxu0 %v338
    %340 = vmatprep.subr.mxu0 0.0
    %341 = vmatpush1.msra.mxu0 0.0
    %342 = vmatprep.subr.mxu0 0.0
    %343 = vmatpush1.msra.mxu0 0.0
    %344 = vmatprep.subr.mxu0 0.0
    %345 = vmatpush1.msra.mxu0 0.0
    %346 = vmatprep.subr.mxu0 0.0
    %347 = vmatpush1.msra.mxu0 0.0
    %348 = vmatprep.subr.mxu0 0.0
    %349 = vmatpush1.msra.mxu0 0.0
    %350 = vmatprep.subr.mxu0 0.0
    %351 = vmatpush1.msra.mxu0 0.0
    %352 = vmatprep.subr.mxu0 0.0
    %353 = vmatpush1.msra.mxu0 0.0
    %354 = vmatprep.subr.mxu0 0.0
    %355 = vmatpush1.msra.mxu0 0.0
    %356 = vmatprep.subr.mxu0 0.0
    %357 = vmatpush1.msra.mxu0 0.0
    %358 = vmatprep.subr.mxu0 0.0
    %359 = vmatpush1.msra.mxu0 0.0
    %360 = vmatprep.subr.mxu0 0.0
    %361 = vmatpush1.msra.mxu0 0.0
    %362 = vmatprep.subr.mxu0 0.0
    %363 = vmatpush1.msra.mxu0 0.0
    %364 = vmatprep.subr.mxu0 0.0
    %365 = vmatpush1.msra.mxu0 0.0
    %366 = vmatprep.subr.mxu0 0.0
    %367 = vmatpush1.msra.mxu0 0.0
    %368 = vmatprep.subr.mxu0 0.0
    %369 = vmatpush1.msra.mxu0 0.0
    %370 = vmatprep.subr.mxu0 0.0
    %371 = vmatpush1.msra.mxu0 0.0
    %372 = vmatprep.subr.mxu0 0.0
    %373 = vmatpush1.msra.mxu0 0.0
    %374 = vmatprep.subr.mxu0 0.0
    %375 = vmatpush1.msra.mxu0 0.0
    %376 = vmatprep.subr.mxu0 0.0
    %377 = vmatpush1.msra.mxu0 0.0
    %378 = vmatprep.subr.mxu0 0.0
    %379 = vmatpush1.msra.mxu0 0.0
    %380 = vmatprep.subr.mxu0 0.0
    %381 = vmatpush1.msra.mxu0 0.0
    %382 = vmatprep.subr.mxu0 0.0
    %383 = vmatpush1.msra.mxu0 0.0
    %384 = vmatprep.subr.mxu0 0.0
    %385 = vmatpush1.msra.mxu0 0.0
    %386 = vmatprep.subr.mxu0 0.0
    %387 = vmatpush1.msra.mxu0 0.0
    %388 = vmatprep.subr.mxu0 0.0
    %389 = vmatpush1.msra.mxu0 0.0
    %390 = vmatprep.subr.mxu0 0.0
    %391 = vmatpush1.msra.mxu0 0.0
    %392 = vmatprep.subr.mxu0 0.0
    %393 = vmatpush1.msra.mxu0 0.0
    %394 = vmatprep.subr.mxu0 0.0
    %395 = vmatpush1.msra.mxu0 0.0
    %396 = vmatprep.subr.mxu0 0.0
    %397 = vmatpush1.msra.mxu0 0.0
    %398 = vmatprep.subr.mxu0 0.0
    %399 = vmatpush1.msra.mxu0 0.0
    %400 = vmatprep.subr.mxu0 0.0
    %401 = vmatpush1.msra.mxu0 0.0
    %402 = vmatprep.mubr.f32.mxu0 0.0
    %v403 = vand.u32 %v97, 4294901760
    %v404 = vsub.f32 %v97, %v403
    %v405 = vand.u32 %v404, 4294901760
    %406 = vmatmul.mubr.f32.gmra.mrb[0].mxu0 %v405
    %v407 = vpop.f32.mrb[0].mxu0
    %v408 = vadd.f32 %v332, %v407
    %v409 = vpop.f32.mrb[0].mxu0
    %v410 = vadd.f32 %v334, %v409
    %411 = vdwg.mxu0
    %v412 = vand.u32 %v82, 4294901760
    %v413 = vsub.f32 %v82, %v412
    %v414 = vand.u32 %v413, 4294901760
    %415 = vmatprep.subr.mxu0 %v414
    %v416 = vand.u32 %v81, 4294901760
    %v417 = vsub.f32 %v81, %v416
    %v418 = vand.u32 %v417, 4294901760
    %419 = vmatpush1.msra.mxu0 %v418
    %420 = vmatprep.subr.mxu0 0.0
    %421 = vmatpush1.msra.mxu0 0.0
    %422 = vmatprep.subr.mxu0 0.0
    %423 = vmatpush1.msra.mxu0 0.0
    %424 = vmatprep.subr.mxu0 0.0
    %425 = vmatpush1.msra.mxu0 0.0
    %426 = vmatprep.subr.mxu0 0.0
    %427 = vmatpush1.msra.mxu0 0.0
    %428 = vmatprep.subr.mxu0 0.0
    %429 = vmatpush1.msra.mxu0 0.0
    %430 = vmatprep.subr.mxu0 0.0
    %431 = vmatpush1.msra.mxu0 0.0
    %432 = vmatprep.subr.mxu0 0.0
    %433 = vmatpush1.msra.mxu0 0.0
    %434 = vmatprep.subr.mxu0 0.0
    %435 = vmatpush1.msra.mxu0 0.0
    %436 = vmatprep.subr.mxu0 0.0
    %437 = vmatpush1.msra.mxu0 0.0
    %438 = vmatprep.subr.mxu0 0.0
    %439 = vmatpush1.msra.mxu0 0.0
    %440 = vmatprep.subr.mxu0 0.0
    %441 = vmatpush1.msra.mxu0 0.0
    %442 = vmatprep.subr.mxu0 0.0
    %443 = vmatpush1.msra.mxu0 0.0
    %444 = vmatprep.subr.mxu0 0.0
    %445 = vmatpush1.msra.mxu0 0.0
    %446 = vmatprep.subr.mxu0 0.0
    %447 = vmatpush1.msra.mxu0 0.0
    %448 = vmatprep.subr.mxu0 0.0
    %449 = vmatpush1.msra.mxu0 0.0
    %450 = vmatprep.subr.mxu0 0.0
    %451 = vmatpush1.msra.mxu0 0.0
    %452 = vmatprep.subr.mxu0 0.0
    %453 = vmatpush1.msra.mxu0 0.0
    %454 = vmatprep.subr.mxu0 0.0
    %455 = vmatpush1.msra.mxu0 0.0
    %456 = vmatprep.subr.mxu0 0.0
    %457 = vmatpush1.msra.mxu0 0.0
    %458 = vmatprep.subr.mxu0 0.0
    %459 = vmatpush1.msra.mxu0 0.0
    %460 = vmatprep.subr.mxu0 0.0
    %461 = vmatpush1.msra.mxu0 0.0
    %462 = vmatprep.subr.mxu0 0.0
    %463 = vmatpush1.msra.mxu0 0.0
    %464 = vmatprep.subr.mxu0 0.0
    %465 = vmatpush1.msra.mxu0 0.0
    %466 = vmatprep.subr.mxu0 0.0
    %467 = vmatpush1.msra.mxu0 0.0
    %468 = vmatprep.subr.mxu0 0.0
    %469 = vmatpush1.msra.mxu0 0.0
    %470 = vmatprep.subr.mxu0 0.0
    %471 = vmatpush1.msra.mxu0 0.0
    %472 = vmatprep.subr.mxu0 0.0
    %473 = vmatpush1.msra.mxu0 0.0
    %474 = vmatprep.subr.mxu0 0.0
    %475 = vmatpush1.msra.mxu0 0.0
    %476 = vmatprep.subr.mxu0 0.0
    %477 = vmatpush1.msra.mxu0 0.0
    %478 = vmatprep.subr.mxu0 0.0
    %479 = vmatpush1.msra.mxu0 0.0
    %480 = vmatprep.subr.mxu0 0.0
    %481 = vmatpush1.msra.mxu0 0.0
    %482 = vmatprep.mubr.f32.mxu0 0.0
    %v483 = vand.u32 %v97, 4294901760
    %484 = vmatmul.mubr.f32.gmra.mrb[0].mxu0 %v483
    %v485 = vpop.f32.mrb[0].mxu0
    %v486 = vadd.f32 %v408, %v485
    %v487 = vpop.f32.mrb[0].mxu0
    %v488 = vadd.f32 %v410, %v487
    %489 = vdwg.mxu0
    %v490 = vand.u32 %v82, 4294901760
    %491 = vmatprep.subr.mxu0 %v490
    %v492 = vand.u32 %v81, 4294901760
    %493 = vmatpush1.msra.mxu0 %v492
    %494 = vmatprep.subr.mxu0 0.0
    %495 = vmatpush1.msra.mxu0 0.0
    %496 = vmatprep.subr.mxu0 0.0
    %497 = vmatpush1.msra.mxu0 0.0
    %498 = vmatprep.subr.mxu0 0.0
    %499 = vmatpush1.msra.mxu0 0.0
    %500 = vmatprep.subr.mxu0 0.0
    %501 = vmatpush1.msra.mxu0 0.0
    %502 = vmatprep.subr.mxu0 0.0
    %503 = vmatpush1.msra.mxu0 0.0
    %504 = vmatprep.subr.mxu0 0.0
    %505 = vmatpush1.msra.mxu0 0.0
    %506 = vmatprep.subr.mxu0 0.0
    %507 = vmatpush1.msra.mxu0 0.0
    %508 = vmatprep.subr.mxu0 0.0
    %509 = vmatpush1.msra.mxu0 0.0
    %510 = vmatprep.subr.mxu0 0.0
    %511 = vmatpush1.msra.mxu0 0.0
    %512 = vmatprep.subr.mxu0 0.0
    %513 = vmatpush1.msra.mxu0 0.0
    %514 = vmatprep.subr.mxu0 0.0
    %515 = vmatpush1.msra.mxu0 0.0
    %516 = vmatprep.subr.mxu0 0.0
    %517 = vmatpush1.msra.mxu0 0.0
    %518 = vmatprep.subr.mxu0 0.0
    %519 = vmatpush1.msra.mxu0 0.0
    %520 = vmatprep.subr.mxu0 0.0
    %521 = vmatpush1.msra.mxu0 0.0
    %522 = vmatprep.subr.mxu0 0.0
    %523 = vmatpush1.msra.mxu0 0.0
    %524 = vmatprep.subr.mxu0 0.0
    %525 = vmatpush1.msra.mxu0 0.0
    %526 = vmatprep.subr.mxu0 0.0
    %527 = vmatpush1.msra.mxu0 0.0
    %528 = vmatprep.subr.mxu0 0.0
    %529 = vmatpush1.msra.mxu0 0.0
    %530 = vmatprep.subr.mxu0 0.0
    %531 = vmatpush1.msra.mxu0 0.0
    %532 = vmatprep.subr.mxu0 0.0
    %533 = vmatpush1.msra.mxu0 0.0
    %534 = vmatprep.subr.mxu0 0.0
    %535 = vmatpush1.msra.mxu0 0.0
    %536 = vmatprep.subr.mxu0 0.0
    %537 = vmatpush1.msra.mxu0 0.0
    %538 = vmatprep.subr.mxu0 0.0
    %539 = vmatpush1.msra.mxu0 0.0
    %540 = vmatprep.subr.mxu0 0.0
    %541 = vmatpush1.msra.mxu0 0.0
    %542 = vmatprep.subr.mxu0 0.0
    %543 = vmatpush1.msra.mxu0 0.0
    %544 = vmatprep.subr.mxu0 0.0
    %545 = vmatpush1.msra.mxu0 0.0
    %546 = vmatprep.subr.mxu0 0.0
    %547 = vmatpush1.msra.mxu0 0.0
    %548 = vmatprep.subr.mxu0 0.0
    %549 = vmatpush1.msra.mxu0 0.0
    %550 = vmatprep.subr.mxu0 0.0
    %551 = vmatpush1.msra.mxu0 0.0
    %552 = vmatprep.subr.mxu0 0.0
    %553 = vmatpush1.msra.mxu0 0.0
    %554 = vmatprep.subr.mxu0 0.0
    %555 = vmatpush1.msra.mxu0 0.0
    %556 = vmatprep.mubr.f32.mxu0 0.0
    %v557 = vand.u32 %v97, 4294901760
    %558 = vmatmul.mubr.f32.gmra.mrb[0].mxu0 %v557
    %v559 = vpop.f32.mrb[0].mxu0
    %v560 = vadd.f32 %v486, %v559
    %v561 = vpop.f32.mrb[0].mxu0
    %v562 = vadd.f32 %v488, %v561
    %563 = vdwg.mxu0
    %v564 = vmax.f32 %v560, 0.0
    %v565 = vmax.f32 %v562, 0.0
    %v566 = vld [vmem:[#allocation7] sm:$0xff]
    %v567 = vld [vmem:[#allocation7 + $0x8] sm:$0xff]
    %v568 = vld [vmem:[#allocation7 + $0x10] sm:$0xff]
    %v569 = vld [vmem:[#allocation7 + $0x18] sm:$0xff]
    %v570 = vld [vmem:[#allocation7 + $0x20] sm:$0xff]
    %v571 = vld [vmem:[#allocation7 + $0x28] sm:$0xff]
    %v572 = vld [vmem:[#allocation7 + $0x30] sm:$0xff]
    %v573 = vld [vmem:[#allocation7 + $0x38] sm:$0xff]
    %v574 = vld [vmem:[#allocation7 + $0x40] sm:$0xff]
    %v575 = vld [vmem:[#allocation7 + $0x48] sm:$0xff]
    %v576 = vld [vmem:[#allocation7 + $0x50] sm:$0xff]
    %v577 = vld [vmem:[#allocation7 + $0x58] sm:$0xff]
    %v578 = vld [vmem:[#allocation7 + $0x60] sm:$0xff]
    %v579 = vld [vmem:[#allocation7 + $0x68] sm:$0xff]
    %v580 = vld [vmem:[#allocation7 + $0x70] sm:$0xff]
    %v581 = vld [vmem:[#allocation7 + $0x78] sm:$0xff]
    %v582 = vld [vmem:[#allocation7 + $0x80] sm:$0xff]
    %v583 = vld [vmem:[#allocation7 + $0x88] sm:$0xff]
    %v584 = vld [vmem:[#allocation7 + $0x90] sm:$0xff]
    %v585 = vld [vmem:[#allocation7 + $0x98] sm:$0xff]
    %v586 = vld [vmem:[#allocation7 + $0xa0] sm:$0xff]
    %v587 = vld [vmem:[#allocation7 + $0xa8] sm:$0xff]
    %v588 = vld [vmem:[#allocation7 + $0xb0] sm:$0xff]
    %v589 = vld [vmem:[#allocation7 + $0xb8] sm:$0xff]
    %v590 = vld [vmem:[#allocation7 + $0xc0] sm:$0xff]
    %v591 = vld [vmem:[#allocation7 + $0xc8] sm:$0xff]
    %v592 = vld [vmem:[#allocation7 + $0xd0] sm:$0xff]
    %v593 = vld [vmem:[#allocation7 + $0xd8] sm:$0xff]
    %v594 = vld [vmem:[#allocation7 + $0xe0] sm:$0xff]
    %v595 = vld [vmem:[#allocation7 + $0xe8] sm:$0xff]
    %v596 = vld [vmem:[#allocation7 + $0xf0] sm:$0xff]
    %v597 = vld [vmem:[#allocation7 + $0xf8] sm:$0xff]
    %v598 = vld [vmem:[#allocation7 + $0x100] sm:$0xff]
    %v599 = vld [vmem:[#allocation7 + $0x108] sm:$0xff]
    %v600 = vld [vmem:[#allocation7 + $0x110] sm:$0xff]
    %v601 = vld [vmem:[#allocation7 + $0x118] sm:$0xff]
    %v602 = vld [vmem:[#allocation7 + $0x120] sm:$0xff]
    %v603 = vld [vmem:[#allocation7 + $0x128] sm:$0xff]
    %v604 = vld [vmem:[#allocation7 + $0x130] sm:$0xff]
    %v605 = vld [vmem:[#allocation7 + $0x138] sm:$0xff]
    %v606 = vld [vmem:[#allocation7 + $0x140] sm:$0xff]
    %v607 = vld [vmem:[#allocation7 + $0x148] sm:$0xff]
    %v608 = vld [vmem:[#allocation7 + $0x150] sm:$0xff]
    %v609 = vld [vmem:[#allocation7 + $0x158] sm:$0xff]
    %v610 = vld [vmem:[#allocation7 + $0x160] sm:$0xff]
    %v611 = vld [vmem:[#allocation7 + $0x168] sm:$0xff]
    %v612 = vld [vmem:[#allocation7 + $0x170] sm:$0xff]
    %v613 = vld [vmem:[#allocation7 + $0x178] sm:$0xff]
    %v614 = vld [vmem:[#allocation7 + $0x180] sm:$0xff]
    %v615 = vld [vmem:[#allocation7 + $0x188] sm:$0xff]
    %v616 = vld [vmem:[#allocation7 + $0x190] sm:$0xff]
    %v617 = vld [vmem:[#allocation7 + $0x198] sm:$0xff]
    %v618 = vld [vmem:[#allocation7 + $0x1a0] sm:$0xff]
    %v619 = vld [vmem:[#allocation7 + $0x1a8] sm:$0xff]
    %v620 = vld [vmem:[#allocation7 + $0x1b0] sm:$0xff]
    %v621 = vld [vmem:[#allocation7 + $0x1b8] sm:$0xff]
    %v622 = vld [vmem:[#allocation7 + $0x1c0] sm:$0xff]
    %v623 = vld [vmem:[#allocation7 + $0x1c8] sm:$0xff]
    %v624 = vld [vmem:[#allocation7 + $0x1d0] sm:$0xff]
    %v625 = vld [vmem:[#allocation7 + $0x1d8] sm:$0xff]
    %v626 = vld [vmem:[#allocation7 + $0x1e0] sm:$0xff]
    %v627 = vld [vmem:[#allocation7 + $0x1e8] sm:$0xff]
    %v628 = vld [vmem:[#allocation7 + $0x1f0] sm:$0xff]
    %v629 = vld [vmem:[#allocation7 + $0x1f8] sm:$0xff]
    %v630 = vld [vmem:[%s4] sm:$0x3]
    %v632 = vlaneseq
    %v633 = vshrl.u32 %v632, 7
    %v634 = vsub.s32 0, %v633
    %v635 = vrot.slane %v630, %v634
    %v636 = vlaneseq
    %v637 = vshrl.u32 %v636, 7
    %v638 = vsub.s32 1, %v637
    %v639 = vrot.slane %v630, %v638
    %v642 = vand.u32 %v567, 4294901760
    %643 = vmatprep.subr.mxu0 %v642
    %v644 = vand.u32 %v566, 4294901760
    %645 = vmatpush1.msra.mxu0 %v644
    %v646 = vand.u32 %v569, 4294901760
    %647 = vmatprep.subr.mxu0 %v646
    %v648 = vand.u32 %v568, 4294901760
    %649 = vmatpush1.msra.mxu0 %v648
    %v650 = vand.u32 %v571, 4294901760
    %651 = vmatprep.subr.mxu0 %v650
    %v652 = vand.u32 %v570, 4294901760
    %653 = vmatpush1.msra.mxu0 %v652
    %v654 = vand.u32 %v573, 4294901760
    %655 = vmatprep.subr.mxu0 %v654
    %v656 = vand.u32 %v572, 4294901760
    %657 = vmatpush1.msra.mxu0 %v656
    %v658 = vand.u32 %v575, 4294901760
    %659 = vmatprep.subr.mxu0 %v658
    %v660 = vand.u32 %v574, 4294901760
    %661 = vmatpush1.msra.mxu0 %v660
    %v662 = vand.u32 %v577, 4294901760
    %663 = vmatprep.subr.mxu0 %v662
    %v664 = vand.u32 %v576, 4294901760
    %665 = vmatpush1.msra.mxu0 %v664
    %v666 = vand.u32 %v579, 4294901760
    %667 = vmatprep.subr.mxu0 %v666
    %v668 = vand.u32 %v578, 4294901760
    %669 = vmatpush1.msra.mxu0 %v668
    %v670 = vand.u32 %v581, 4294901760
    %671 = vmatprep.subr.mxu0 %v670
    %v672 = vand.u32 %v580, 4294901760
    %673 = vmatpush1.msra.mxu0 %v672
    %v674 = vand.u32 %v583, 4294901760
    %675 = vmatprep.subr.mxu0 %v674
    %v676 = vand.u32 %v582, 4294901760
    %677 = vmatpush1.msra.mxu0 %v676
    %v678 = vand.u32 %v585, 4294901760
    %679 = vmatprep.subr.mxu0 %v678
    %v680 = vand.u32 %v584, 4294901760
    %681 = vmatpush1.msra.mxu0 %v680
    %v682 = vand.u32 %v587, 4294901760
    %683 = vmatprep.subr.mxu0 %v682
    %v684 = vand.u32 %v586, 4294901760
    %685 = vmatpush1.msra.mxu0 %v684
    %v686 = vand.u32 %v589, 4294901760
    %687 = vmatprep.subr.mxu0 %v686
    %v688 = vand.u32 %v588, 4294901760
    %689 = vmatpush1.msra.mxu0 %v688
    %v690 = vand.u32 %v591, 4294901760
    %691 = vmatprep.subr.mxu0 %v690
    %v692 = vand.u32 %v590, 4294901760
    %693 = vmatpush1.msra.mxu0 %v692
    %v694 = vand.u32 %v593, 4294901760
    %695 = vmatprep.subr.mxu0 %v694
    %v696 = vand.u32 %v592, 4294901760
    %697 = vmatpush1.msra.mxu0 %v696
    %v698 = vand.u32 %v595, 4294901760
    %699 = vmatprep.subr.mxu0 %v698
    %v700 = vand.u32 %v594, 4294901760
    %701 = vmatpush1.msra.mxu0 %v700
    %v702 = vand.u32 %v597, 4294901760
    %703 = vmatprep.subr.mxu0 %v702
    %v704 = vand.u32 %v596, 4294901760
    %705 = vmatpush1.msra.mxu0 %v704
    %v706 = vand.u32 %v599, 4294901760
    %707 = vmatprep.subr.mxu0 %v706
    %v708 = vand.u32 %v598, 4294901760
    %709 = vmatpush1.msra.mxu0 %v708
    %v710 = vand.u32 %v601, 4294901760
    %711 = vmatprep.subr.mxu0 %v710
    %v712 = vand.u32 %v600, 4294901760
    %713 = vmatpush1.msra.mxu0 %v712
    %v714 = vand.u32 %v603, 4294901760
    %715 = vmatprep.subr.mxu0 %v714
    %v716 = vand.u32 %v602, 4294901760
    %717 = vmatpush1.msra.mxu0 %v716
    %v718 = vand.u32 %v605, 4294901760
    %719 = vmatprep.subr.mxu0 %v718
    %v720 = vand.u32 %v604, 4294901760
    %721 = vmatpush1.msra.mxu0 %v720
    %v722 = vand.u32 %v607, 4294901760
    %723 = vmatprep.subr.mxu0 %v722
    %v724 = vand.u32 %v606, 4294901760
    %725 = vmatpush1.msra.mxu0 %v724
    %v726 = vand.u32 %v609, 4294901760
    %727 = vmatprep.subr.mxu0 %v726
    %v728 = vand.u32 %v608, 4294901760
    %729 = vmatpush1.msra.mxu0 %v728
    %v730 = vand.u32 %v611, 4294901760
    %731 = vmatprep.subr.mxu0 %v730
    %v732 = vand.u32 %v610, 4294901760
    %733 = vmatpush1.msra.mxu0 %v732
    %v734 = vand.u32 %v613, 4294901760
    %735 = vmatprep.subr.mxu0 %v734
    %v736 = vand.u32 %v612, 4294901760
    %737 = vmatpush1.msra.mxu0 %v736
    %v738 = vand.u32 %v615, 4294901760
    %739 = vmatprep.subr.mxu0 %v738
    %v740 = vand.u32 %v614, 4294901760
    %741 = vmatpush1.msra.mxu0 %v740
    %v742 = vand.u32 %v617, 4294901760
    %743 = vmatprep.subr.mxu0 %v742
    %v744 = vand.u32 %v616, 4294901760
    %745 = vmatpush1.msra.mxu0 %v744
    %v746 = vand.u32 %v619, 4294901760
    %747 = vmatprep.subr.mxu0 %v746
    %v748 = vand.u32 %v618, 4294901760
    %749 = vmatpush1.msra.mxu0 %v748
    %v750 = vand.u32 %v621, 4294901760
    %751 = vmatprep.subr.mxu0 %v750
    %v752 = vand.u32 %v620, 4294901760
    %753 = vmatpush1.msra.mxu0 %v752
    %v754 = vand.u32 %v623, 4294901760
    %755 = vmatprep.subr.mxu0 %v754
    %v756 = vand.u32 %v622, 4294901760
    %757 = vmatpush1.msra.mxu0 %v756
    %v758 = vand.u32 %v625, 4294901760
    %759 = vmatprep.subr.mxu0 %v758
    %v760 = vand.u32 %v624, 4294901760
    %761 = vmatpush1.msra.mxu0 %v760
    %v762 = vand.u32 %v627, 4294901760
    %763 = vmatprep.subr.mxu0 %v762
    %v764 = vand.u32 %v626, 4294901760
    %765 = vmatpush1.msra.mxu0 %v764
    %v766 = vand.u32 %v629, 4294901760
    %767 = vmatprep.subr.mxu0 %v766
    %v768 = vand.u32 %v628, 4294901760
    %769 = vmatpush1.msra.mxu0 %v768
    %v770 = vand.u32 %v565, 4294901760
    %v771 = vsub.f32 %v565, %v770
    %v772 = vand.u32 %v771, 4294901760
    %v773 = vsub.f32 %v771, %v772
    %v774 = vand.u32 %v773, 4294901760
    %775 = vmatprep.mubr.f32.mxu0 %v774
    %v776 = vand.u32 %v564, 4294901760
    %v777 = vsub.f32 %v564, %v776
    %v778 = vand.u32 %v777, 4294901760
    %v779 = vsub.f32 %v777, %v778
    %v780 = vand.u32 %v779, 4294901760
    %781 = vmatmul.mubr.f32.gmra.mrb[0].mxu0 %v780
    %v782 = vpop.f32.mrb[0].mxu0
    %v783 = vadd.f32 %v635, %v782
    %v784 = vpop.f32.mrb[0].mxu0
    %v785 = vadd.f32 %v639, %v784
    %786 = vdwg.mxu0
    %v787 = vand.u32 %v567, 4294901760
    %v788 = vsub.f32 %v567, %v787
    %v789 = vand.u32 %v788, 4294901760
    %v790 = vsub.f32 %v788, %v789
    %v791 = vand.u32 %v790, 4294901760
    %792 = vmatprep.subr.mxu0 %v791
    %v793 = vand.u32 %v566, 4294901760
    %v794 = vsub.f32 %v566, %v793
    %v795 = vand.u32 %v794, 4294901760
    %v796 = vsub.f32 %v794, %v795
    %v797 = vand.u32 %v796, 4294901760
    %798 = vmatpush1.msra.mxu0 %v797
    %v799 = vand.u32 %v569, 4294901760
    %v800 = vsub.f32 %v569, %v799
    %v801 = vand.u32 %v800, 4294901760
    %v802 = vsub.f32 %v800, %v801
    %v803 = vand.u32 %v802, 4294901760
    %804 = vmatprep.subr.mxu0 %v803
    %v805 = vand.u32 %v568, 4294901760
    %v806 = vsub.f32 %v568, %v805
    %v807 = vand.u32 %v806, 4294901760
    %v808 = vsub.f32 %v806, %v807
    %v809 = vand.u32 %v808, 4294901760
    %810 = vmatpush1.msra.mxu0 %v809
    %v811 = vand.u32 %v571, 4294901760
    %v812 = vsub.f32 %v571, %v811
    %v813 = vand.u32 %v812, 4294901760
    %v814 = vsub.f32 %v812, %v813
    %v815 = vand.u32 %v814, 4294901760
    %816 = vmatprep.subr.mxu0 %v815
    %v817 = vand.u32 %v570, 4294901760
    %v818 = vsub.f32 %v570, %v817
    %v819 = vand.u32 %v818, 4294901760
    %v820 = vsub.f32 %v818, %v819
    %v821 = vand.u32 %v820, 4294901760
    %822 = vmatpush1.msra.mxu0 %v821
    %v823 = vand.u32 %v573, 4294901760
    %v824 = vsub.f32 %v573, %v823
    %v825 = vand.u32 %v824, 4294901760
    %v826 = vsub.f32 %v824, %v825
    %v827 = vand.u32 %v826, 4294901760
    %828 = vmatprep.subr.mxu0 %v827
    %v829 = vand.u32 %v572, 4294901760
    %v830 = vsub.f32 %v572, %v829
    %v831 = vand.u32 %v830, 4294901760
    %v832 = vsub.f32 %v830, %v831
    %v833 = vand.u32 %v832, 4294901760
    %834 = vmatpush1.msra.mxu0 %v833
    %v835 = vand.u32 %v575, 4294901760
    %v836 = vsub.f32 %v575, %v835
    %v837 = vand.u32 %v836, 4294901760
    %v838 = vsub.f32 %v836, %v837
    %v839 = vand.u32 %v838, 4294901760
    %840 = vmatprep.subr.mxu0 %v839
    %v841 = vand.u32 %v574, 4294901760
    %v842 = vsub.f32 %v574, %v841
    %v843 = vand.u32 %v842, 4294901760
    %v844 = vsub.f32 %v842, %v843
    %v845 = vand.u32 %v844, 4294901760
    %846 = vmatpush1.msra.mxu0 %v845
    %v847 = vand.u32 %v577, 4294901760
    %v848 = vsub.f32 %v577, %v847
    %v849 = vand.u32 %v848, 4294901760
    %v850 = vsub.f32 %v848, %v849
    %v851 = vand.u32 %v850, 4294901760
    %852 = vmatprep.subr.mxu0 %v851
    %v853 = vand.u32 %v576, 4294901760
    %v854 = vsub.f32 %v576, %v853
    %v855 = vand.u32 %v854, 4294901760
    %v856 = vsub.f32 %v854, %v855
    %v857 = vand.u32 %v856, 4294901760
    %858 = vmatpush1.msra.mxu0 %v857
    %v859 = vand.u32 %v579, 4294901760
    %v860 = vsub.f32 %v579, %v859
    %v861 = vand.u32 %v860, 4294901760
    %v862 = vsub.f32 %v860, %v861
    %v863 = vand.u32 %v862, 4294901760
    %864 = vmatprep.subr.mxu0 %v863
    %v865 = vand.u32 %v578, 4294901760
    %v866 = vsub.f32 %v578, %v865
    %v867 = vand.u32 %v866, 4294901760
    %v868 = vsub.f32 %v866, %v867
    %v869 = vand.u32 %v868, 4294901760
    %870 = vmatpush1.msra.mxu0 %v869
    %v871 = vand.u32 %v581, 4294901760
    %v872 = vsub.f32 %v581, %v871
    %v873 = vand.u32 %v872, 4294901760
    %v874 = vsub.f32 %v872, %v873
    %v875 = vand.u32 %v874, 4294901760
    %876 = vmatprep.subr.mxu0 %v875
    %v877 = vand.u32 %v580, 4294901760
    %v878 = vsub.f32 %v580, %v877
    %v879 = vand.u32 %v878, 4294901760
    %v880 = vsub.f32 %v878, %v879
    %v881 = vand.u32 %v880, 4294901760
    %882 = vmatpush1.msra.mxu0 %v881
    %v883 = vand.u32 %v583, 4294901760
    %v884 = vsub.f32 %v583, %v883
    %v885 = vand.u32 %v884, 4294901760
    %v886 = vsub.f32 %v884, %v885
    %v887 = vand.u32 %v886, 4294901760
    %888 = vmatprep.subr.mxu0 %v887
    %v889 = vand.u32 %v582, 4294901760
    %v890 = vsub.f32 %v582, %v889
    %v891 = vand.u32 %v890, 4294901760
    %v892 = vsub.f32 %v890, %v891
    %v893 = vand.u32 %v892, 4294901760
    %894 = vmatpush1.msra.mxu0 %v893
    %v895 = vand.u32 %v585, 4294901760
    %v896 = vsub.f32 %v585, %v895
    %v897 = vand.u32 %v896, 4294901760
    %v898 = vsub.f32 %v896, %v897
    %v899 = vand.u32 %v898, 4294901760
    %900 = vmatprep.subr.mxu0 %v899
    %v901 = vand.u32 %v584, 4294901760
    %v902 = vsub.f32 %v584, %v901
    %v903 = vand.u32 %v902, 4294901760
    %v904 = vsub.f32 %v902, %v903
    %v905 = vand.u32 %v904, 4294901760
    %906 = vmatpush1.msra.mxu0 %v905
    %v907 = vand.u32 %v587, 4294901760
    %v908 = vsub.f32 %v587, %v907
    %v909 = vand.u32 %v908, 4294901760
    %v910 = vsub.f32 %v908, %v909
    %v911 = vand.u32 %v910, 4294901760
    %912 = vmatprep.subr.mxu0 %v911
    %v913 = vand.u32 %v586, 4294901760
    %v914 = vsub.f32 %v586, %v913
    %v915 = vand.u32 %v914, 4294901760
    %v916 = vsub.f32 %v914, %v915
    %v917 = vand.u32 %v916, 4294901760
    %918 = vmatpush1.msra.mxu0 %v917
    %v919 = vand.u32 %v589, 4294901760
    %v920 = vsub.f32 %v589, %v919
    %v921 = vand.u32 %v920, 4294901760
    %v922 = vsub.f32 %v920, %v921
    %v923 = vand.u32 %v922, 4294901760
    %924 = vmatprep.subr.mxu0 %v923
    %v925 = vand.u32 %v588, 4294901760
    %v926 = vsub.f32 %v588, %v925
    %v927 = vand.u32 %v926, 4294901760
    %v928 = vsub.f32 %v926, %v927
    %v929 = vand.u32 %v928, 4294901760
    %930 = vmatpush1.msra.mxu0 %v929
    %v931 = vand.u32 %v591, 4294901760
    %v932 = vsub.f32 %v591, %v931
    %v933 = vand.u32 %v932, 4294901760
    %v934 = vsub.f32 %v932, %v933
    %v935 = vand.u32 %v934, 4294901760
    %936 = vmatprep.subr.mxu0 %v935
    %v937 = vand.u32 %v590, 4294901760
    %v938 = vsub.f32 %v590, %v937
    %v939 = vand.u32 %v938, 4294901760
    %v940 = vsub.f32 %v938, %v939
    %v941 = vand.u32 %v940, 4294901760
    %942 = vmatpush1.msra.mxu0 %v941
    %v943 = vand.u32 %v593, 4294901760
    %v944 = vsub.f32 %v593, %v943
    %v945 = vand.u32 %v944, 4294901760
    %v946 = vsub.f32 %v944, %v945
    %v947 = vand.u32 %v946, 4294901760
    %948 = vmatprep.subr.mxu0 %v947
    %v949 = vand.u32 %v592, 4294901760
    %v950 = vsub.f32 %v592, %v949
    %v951 = vand.u32 %v950, 4294901760
    %v952 = vsub.f32 %v950, %v951
    %v953 = vand.u32 %v952, 4294901760
    %954 = vmatpush1.msra.mxu0 %v953
    %v955 = vand.u32 %v595, 4294901760
    %v956 = vsub.f32 %v595, %v955
    %v957 = vand.u32 %v956, 4294901760
    %v958 = vsub.f32 %v956, %v957
    %v959 = vand.u32 %v958, 4294901760
    %960 = vmatprep.subr.mxu0 %v959
    %v961 = vand.u32 %v594, 4294901760
    %v962 = vsub.f32 %v594, %v961
    %v963 = vand.u32 %v962, 4294901760
    %v964 = vsub.f32 %v962, %v963
    %v965 = vand.u32 %v964, 4294901760
    %966 = vmatpush1.msra.mxu0 %v965
    %v967 = vand.u32 %v597, 4294901760
    %v968 = vsub.f32 %v597, %v967
    %v969 = vand.u32 %v968, 4294901760
    %v970 = vsub.f32 %v968, %v969
    %v971 = vand.u32 %v970, 4294901760
    %972 = vmatprep.subr.mxu0 %v971
    %v973 = vand.u32 %v596, 4294901760
    %v974 = vsub.f32 %v596, %v973
    %v975 = vand.u32 %v974, 4294901760
    %v976 = vsub.f32 %v974, %v975
    %v977 = vand.u32 %v976, 4294901760
    %978 = vmatpush1.msra.mxu0 %v977
    %v979 = vand.u32 %v599, 4294901760
    %v980 = vsub.f32 %v599, %v979
    %v981 = vand.u32 %v980, 4294901760
    %v982 = vsub.f32 %v980, %v981
    %v983 = vand.u32 %v982, 4294901760
    %984 = vmatprep.subr.mxu0 %v983
    %v985 = vand.u32 %v598, 4294901760
    %v986 = vsub.f32 %v598, %v985
    %v987 = vand.u32 %v986, 4294901760
    %v988 = vsub.f32 %v986, %v987
    %v989 = vand.u32 %v988, 4294901760
    %990 = vmatpush1.msra.mxu0 %v989
    %v991 = vand.u32 %v601, 4294901760
    %v992 = vsub.f32 %v601, %v991
    %v993 = vand.u32 %v992, 4294901760
    %v994 = vsub.f32 %v992, %v993
    %v995 = vand.u32 %v994, 4294901760
    %996 = vmatprep.subr.mxu0 %v995
    %v997 = vand.u32 %v600, 4294901760
    %v998 = vsub.f32 %v600, %v997
    %v999 = vand.u32 %v998, 4294901760
    %v1000 = vsub.f32 %v998, %v999
    %v1001 = vand.u32 %v1000, 4294901760
    %1002 = vmatpush1.msra.mxu0 %v1001
    %v1003 = vand.u32 %v603, 4294901760
    %v1004 = vsub.f32 %v603, %v1003
    %v1005 = vand.u32 %v1004, 4294901760
    %v1006 = vsub.f32 %v1004, %v1005
    %v1007 = vand.u32 %v1006, 4294901760
    %1008 = vmatprep.subr.mxu0 %v1007
    %v1009 = vand.u32 %v602, 4294901760
    %v1010 = vsub.f32 %v602, %v1009
    %v1011 = vand.u32 %v1010, 4294901760
    %v1012 = vsub.f32 %v1010, %v1011
    %v1013 = vand.u32 %v1012, 4294901760
    %1014 = vmatpush1.msra.mxu0 %v1013
    %v1015 = vand.u32 %v605, 4294901760
    %v1016 = vsub.f32 %v605, %v1015
    %v1017 = vand.u32 %v1016, 4294901760
    %v1018 = vsub.f32 %v1016, %v1017
    %v1019 = vand.u32 %v1018, 4294901760
    %1020 = vmatprep.subr.mxu0 %v1019
    %v1021 = vand.u32 %v604, 4294901760
    %v1022 = vsub.f32 %v604, %v1021
    %v1023 = vand.u32 %v1022, 4294901760
    %v1024 = vsub.f32 %v1022, %v1023
    %v1025 = vand.u32 %v1024, 4294901760
    %1026 = vmatpush1.msra.mxu0 %v1025
    %v1027 = vand.u32 %v607, 4294901760
    %v1028 = vsub.f32 %v607, %v1027
    %v1029 = vand.u32 %v1028, 4294901760
    %v1030 = vsub.f32 %v1028, %v1029
    %v1031 = vand.u32 %v1030, 4294901760
    %1032 = vmatprep.subr.mxu0 %v1031
    %v1033 = vand.u32 %v606, 4294901760
    %v1034 = vsub.f32 %v606, %v1033
    %v1035 = vand.u32 %v1034, 4294901760
    %v1036 = vsub.f32 %v1034, %v1035
    %v1037 = vand.u32 %v1036, 4294901760
    %1038 = vmatpush1.msra.mxu0 %v1037
    %v1039 = vand.u32 %v609, 4294901760
    %v1040 = vsub.f32 %v609, %v1039
    %v1041 = vand.u32 %v1040, 4294901760
    %v1042 = vsub.f32 %v1040, %v1041
    %v1043 = vand.u32 %v1042, 4294901760
    %1044 = vmatprep.subr.mxu0 %v1043
    %v1045 = vand.u32 %v608, 4294901760
    %v1046 = vsub.f32 %v608, %v1045
    %v1047 = vand.u32 %v1046, 4294901760
    %v1048 = vsub.f32 %v1046, %v1047
    %v1049 = vand.u32 %v1048, 4294901760
    %1050 = vmatpush1.msra.mxu0 %v1049
    %v1051 = vand.u32 %v611, 4294901760
    %v1052 = vsub.f32 %v611, %v1051
    %v1053 = vand.u32 %v1052, 4294901760
    %v1054 = vsub.f32 %v1052, %v1053
    %v1055 = vand.u32 %v1054, 4294901760
    %1056 = vmatprep.subr.mxu0 %v1055
    %v1057 = vand.u32 %v610, 4294901760
    %v1058 = vsub.f32 %v610, %v1057
    %v1059 = vand.u32 %v1058, 4294901760
    %v1060 = vsub.f32 %v1058, %v1059
    %v1061 = vand.u32 %v1060, 4294901760
    %1062 = vmatpush1.msra.mxu0 %v1061
    %v1063 = vand.u32 %v613, 4294901760
    %v1064 = vsub.f32 %v613, %v1063
    %v1065 = vand.u32 %v1064, 4294901760
    %v1066 = vsub.f32 %v1064, %v1065
    %v1067 = vand.u32 %v1066, 4294901760
    %1068 = vmatprep.subr.mxu0 %v1067
    %v1069 = vand.u32 %v612, 4294901760
    %v1070 = vsub.f32 %v612, %v1069
    %v1071 = vand.u32 %v1070, 4294901760
    %v1072 = vsub.f32 %v1070, %v1071
    %v1073 = vand.u32 %v1072, 4294901760
    %1074 = vmatpush1.msra.mxu0 %v1073
    %v1075 = vand.u32 %v615, 4294901760
    %v1076 = vsub.f32 %v615, %v1075
    %v1077 = vand.u32 %v1076, 4294901760
    %v1078 = vsub.f32 %v1076, %v1077
    %v1079 = vand.u32 %v1078, 4294901760
    %1080 = vmatprep.subr.mxu0 %v1079
    %v1081 = vand.u32 %v614, 4294901760
    %v1082 = vsub.f32 %v614, %v1081
    %v1083 = vand.u32 %v1082, 4294901760
    %v1084 = vsub.f32 %v1082, %v1083
    %v1085 = vand.u32 %v1084, 4294901760
    %1086 = vmatpush1.msra.mxu0 %v1085
    %v1087 = vand.u32 %v617, 4294901760
    %v1088 = vsub.f32 %v617, %v1087
    %v1089 = vand.u32 %v1088, 4294901760
    %v1090 = vsub.f32 %v1088, %v1089
    %v1091 = vand.u32 %v1090, 4294901760
    %1092 = vmatprep.subr.mxu0 %v1091
    %v1093 = vand.u32 %v616, 4294901760
    %v1094 = vsub.f32 %v616, %v1093
    %v1095 = vand.u32 %v1094, 4294901760
    %v1096 = vsub.f32 %v1094, %v1095
    %v1097 = vand.u32 %v1096, 4294901760
    %1098 = vmatpush1.msra.mxu0 %v1097
    %v1099 = vand.u32 %v619, 4294901760
    %v1100 = vsub.f32 %v619, %v1099
    %v1101 = vand.u32 %v1100, 4294901760
    %v1102 = vsub.f32 %v1100, %v1101
    %v1103 = vand.u32 %v1102, 4294901760
    %1104 = vmatprep.subr.mxu0 %v1103
    %v1105 = vand.u32 %v618, 4294901760
    %v1106 = vsub.f32 %v618, %v1105
    %v1107 = vand.u32 %v1106, 4294901760
    %v1108 = vsub.f32 %v1106, %v1107
    %v1109 = vand.u32 %v1108, 4294901760
    %1110 = vmatpush1.msra.mxu0 %v1109
    %v1111 = vand.u32 %v621, 4294901760
    %v1112 = vsub.f32 %v621, %v1111
    %v1113 = vand.u32 %v1112, 4294901760
    %v1114 = vsub.f32 %v1112, %v1113
    %v1115 = vand.u32 %v1114, 4294901760
    %1116 = vmatprep.subr.mxu0 %v1115
    %v1117 = vand.u32 %v620, 4294901760
    %v1118 = vsub.f32 %v620, %v1117
    %v1119 = vand.u32 %v1118, 4294901760
    %v1120 = vsub.f32 %v1118, %v1119
    %v1121 = vand.u32 %v1120, 4294901760
    %1122 = vmatpush1.msra.mxu0 %v1121
    %v1123 = vand.u32 %v623, 4294901760
    %v1124 = vsub.f32 %v623, %v1123
    %v1125 = vand.u32 %v1124, 4294901760
    %v1126 = vsub.f32 %v1124, %v1125
    %v1127 = vand.u32 %v1126, 4294901760
    %1128 = vmatprep.subr.mxu0 %v1127
    %v1129 = vand.u32 %v622, 4294901760
    %v1130 = vsub.f32 %v622, %v1129
    %v1131 = vand.u32 %v1130, 4294901760
    %v1132 = vsub.f32 %v1130, %v1131
    %v1133 = vand.u32 %v1132, 4294901760
    %1134 = vmatpush1.msra.mxu0 %v1133
    %v1135 = vand.u32 %v625, 4294901760
    %v1136 = vsub.f32 %v625, %v1135
    %v1137 = vand.u32 %v1136, 4294901760
    %v1138 = vsub.f32 %v1136, %v1137
    %v1139 = vand.u32 %v1138, 4294901760
    %1140 = vmatprep.subr.mxu0 %v1139
    %v1141 = vand.u32 %v624, 4294901760
    %v1142 = vsub.f32 %v624, %v1141
    %v1143 = vand.u32 %v1142, 4294901760
    %v1144 = vsub.f32 %v1142, %v1143
    %v1145 = vand.u32 %v1144, 4294901760
    %1146 = vmatpush1.msra.mxu0 %v1145
    %v1147 = vand.u32 %v627, 4294901760
    %v1148 = vsub.f32 %v627, %v1147
    %v1149 = vand.u32 %v1148, 4294901760
    %v1150 = vsub.f32 %v1148, %v1149
    %v1151 = vand.u32 %v1150, 4294901760
    %1152 = vmatprep.subr.mxu0 %v1151
    %v1153 = vand.u32 %v626, 4294901760
    %v1154 = vsub.f32 %v626, %v1153
    %v1155 = vand.u32 %v1154, 4294901760
    %v1156 = vsub.f32 %v1154, %v1155
    %v1157 = vand.u32 %v1156, 4294901760
    %1158 = vmatpush1.msra.mxu0 %v1157
    %v1159 = vand.u32 %v629, 4294901760
    %v1160 = vsub.f32 %v629, %v1159
    %v1161 = vand.u32 %v1160, 4294901760
    %v1162 = vsub.f32 %v1160, %v1161
    %v1163 = vand.u32 %v1162, 4294901760
    %1164 = vmatprep.subr.mxu0 %v1163
    %v1165 = vand.u32 %v628, 4294901760
    %v1166 = vsub.f32 %v628, %v1165
    %v1167 = vand.u32 %v1166, 4294901760
    %v1168 = vsub.f32 %v1166, %v1167
    %v1169 = vand.u32 %v1168, 4294901760
    %1170 = vmatpush1.msra.mxu0 %v1169
    %v1171 = vand.u32 %v565, 4294901760
    %1172 = vmatprep.mubr.f32.mxu0 %v1171
    %v1173 = vand.u32 %v564, 4294901760
    %1174 = vmatmul.mubr.f32.gmra.mrb[0].mxu0 %v1173
    %v1175 = vpop.f32.mrb[0].mxu0
    %v1176 = vadd.f32 %v783, %v1175
    %v1177 = vpop.f32.mrb[0].mxu0
    %v1178 = vadd.f32 %v785, %v1177
    %1179 = vdwg.mxu0
    %v1180 = vand.u32 %v567, 4294901760
    %v1181 = vsub.f32 %v567, %v1180
    %1182 = vmatprep.subr.mxu0 %v1181
    %v1183 = vand.u32 %v566, 4294901760
    %v1184 = vsub.f32 %v566, %v1183
    %1185 = vmatpush1.msra.mxu0 %v1184
    %v1186 = vand.u32 %v569, 4294901760
    %v1187 = vsub.f32 %v569, %v1186
    %1188 = vmatprep.subr.mxu0 %v1187
    %v1189 = vand.u32 %v568, 4294901760
    %v1190 = vsub.f32 %v568, %v1189
    %1191 = vmatpush1.msra.mxu0 %v1190
    %v1192 = vand.u32 %v571, 4294901760
    %v1193 = vsub.f32 %v571, %v1192
    %1194 = vmatprep.subr.mxu0 %v1193
    %v1195 = vand.u32 %v570, 4294901760
    %v1196 = vsub.f32 %v570, %v1195
    %1197 = vmatpush1.msra.mxu0 %v1196
    %v1198 = vand.u32 %v573, 4294901760
    %v1199 = vsub.f32 %v573, %v1198
    %1200 = vmatprep.subr.mxu0 %v1199
    %v1201 = vand.u32 %v572, 4294901760
    %v1202 = vsub.f32 %v572, %v1201
    %1203 = vmatpush1.msra.mxu0 %v1202
    %v1204 = vand.u32 %v575, 4294901760
    %v1205 = vsub.f32 %v575, %v1204
    %1206 = vmatprep.subr.mxu0 %v1205
    %v1207 = vand.u32 %v574, 4294901760
    %v1208 = vsub.f32 %v574, %v1207
    %1209 = vmatpush1.msra.mxu0 %v1208
    %v1210 = vand.u32 %v577, 4294901760
    %v1211 = vsub.f32 %v577, %v1210
    %1212 = vmatprep.subr.mxu0 %v1211
    %v1213 = vand.u32 %v576, 4294901760
    %v1214 = vsub.f32 %v576, %v1213
    %1215 = vmatpush1.msra.mxu0 %v1214
    %v1216 = vand.u32 %v579, 4294901760
    %v1217 = vsub.f32 %v579, %v1216
    %1218 = vmatprep.subr.mxu0 %v1217
    %v1219 = vand.u32 %v578, 4294901760
    %v1220 = vsub.f32 %v578, %v1219
    %1221 = vmatpush1.msra.mxu0 %v1220
    %v1222 = vand.u32 %v581, 4294901760
    %v1223 = vsub.f32 %v581, %v1222
    %1224 = vmatprep.subr.mxu0 %v1223
    %v1225 = vand.u32 %v580, 4294901760
    %v1226 = vsub.f32 %v580, %v1225
    %1227 = vmatpush1.msra.mxu0 %v1226
    %v1228 = vand.u32 %v583, 4294901760
    %v1229 = vsub.f32 %v583, %v1228
    %1230 = vmatprep.subr.mxu0 %v1229
    %v1231 = vand.u32 %v582, 4294901760
    %v1232 = vsub.f32 %v582, %v1231
    %1233 = vmatpush1.msra.mxu0 %v1232
    %v1234 = vand.u32 %v585, 4294901760
    %v1235 = vsub.f32 %v585, %v1234
    %1236 = vmatprep.subr.mxu0 %v1235
    %v1237 = vand.u32 %v584, 4294901760
    %v1238 = vsub.f32 %v584, %v1237
    %1239 = vmatpush1.msra.mxu0 %v1238
    %v1240 = vand.u32 %v587, 4294901760
    %v1241 = vsub.f32 %v587, %v1240
    %1242 = vmatprep.subr.mxu0 %v1241
    %v1243 = vand.u32 %v586, 4294901760
    %v1244 = vsub.f32 %v586, %v1243
    %1245 = vmatpush1.msra.mxu0 %v1244
    %v1246 = vand.u32 %v589, 4294901760
    %v1247 = vsub.f32 %v589, %v1246
    %1248 = vmatprep.subr.mxu0 %v1247
    %v1249 = vand.u32 %v588, 4294901760
    %v1250 = vsub.f32 %v588, %v1249
    %1251 = vmatpush1.msra.mxu0 %v1250
    %v1252 = vand.u32 %v591, 4294901760
    %v1253 = vsub.f32 %v591, %v1252
    %1254 = vmatprep.subr.mxu0 %v1253
    %v1255 = vand.u32 %v590, 4294901760
    %v1256 = vsub.f32 %v590, %v1255
    %1257 = vmatpush1.msra.mxu0 %v1256
    %v1258 = vand.u32 %v593, 4294901760
    %v1259 = vsub.f32 %v593, %v1258
    %1260 = vmatprep.subr.mxu0 %v1259
    %v1261 = vand.u32 %v592, 4294901760
    %v1262 = vsub.f32 %v592, %v1261
    %1263 = vmatpush1.msra.mxu0 %v1262
    %v1264 = vand.u32 %v595, 4294901760
    %v1265 = vsub.f32 %v595, %v1264
    %1266 = vmatprep.subr.mxu0 %v1265
    %v1267 = vand.u32 %v594, 4294901760
    %v1268 = vsub.f32 %v594, %v1267
    %1269 = vmatpush1.msra.mxu0 %v1268
    %v1270 = vand.u32 %v597, 4294901760
    %v1271 = vsub.f32 %v597, %v1270
    %1272 = vmatprep.subr.mxu0 %v1271
    %v1273 = vand.u32 %v596, 4294901760
    %v1274 = vsub.f32 %v596, %v1273
    %1275 = vmatpush1.msra.mxu0 %v1274
    %v1276 = vand.u32 %v599, 4294901760
    %v1277 = vsub.f32 %v599, %v1276
    %1278 = vmatprep.subr.mxu0 %v1277
    %v1279 = vand.u32 %v598, 4294901760
    %v1280 = vsub.f32 %v598, %v1279
    %1281 = vmatpush1.msra.mxu0 %v1280
    %v1282 = vand.u32 %v601, 4294901760
    %v1283 = vsub.f32 %v601, %v1282
    %1284 = vmatprep.subr.mxu0 %v1283
    %v1285 = vand.u32 %v600, 4294901760
    %v1286 = vsub.f32 %v600, %v1285
    %1287 = vmatpush1.msra.mxu0 %v1286
    %v1288 = vand.u32 %v603, 4294901760
    %v1289 = vsub.f32 %v603, %v1288
    %1290 = vmatprep.subr.mxu0 %v1289
    %v1291 = vand.u32 %v602, 4294901760
    %v1292 = vsub.f32 %v602, %v1291
    %1293 = vmatpush1.msra.mxu0 %v1292
    %v1294 = vand.u32 %v605, 4294901760
    %v1295 = vsub.f32 %v605, %v1294
    %1296 = vmatprep.subr.mxu0 %v1295
    %v1297 = vand.u32 %v604, 4294901760
    %v1298 = vsub.f32 %v604, %v1297
    %1299 = vmatpush1.msra.mxu0 %v1298
    %v1300 = vand.u32 %v607, 4294901760
    %v1301 = vsub.f32 %v607, %v1300
    %1302 = vmatprep.subr.mxu0 %v1301
    %v1303 = vand.u32 %v606, 4294901760
    %v1304 = vsub.f32 %v606, %v1303
    %1305 = vmatpush1.msra.mxu0 %v1304
    %v1306 = vand.u32 %v609, 4294901760
    %v1307 = vsub.f32 %v609, %v1306
    %1308 = vmatprep.subr.mxu0 %v1307
    %v1309 = vand.u32 %v608, 4294901760
    %v1310 = vsub.f32 %v608, %v1309
    %1311 = vmatpush1.msra.mxu0 %v1310
    %v1312 = vand.u32 %v611, 4294901760
    %v1313 = vsub.f32 %v611, %v1312
    %1314 = vmatprep.subr.mxu0 %v1313
    %v1315 = vand.u32 %v610, 4294901760
    %v1316 = vsub.f32 %v610, %v1315
    %1317 = vmatpush1.msra.mxu0 %v1316
    %v1318 = vand.u32 %v613, 4294901760
    %v1319 = vsub.f32 %v613, %v1318
    %1320 = vmatprep.subr.mxu0 %v1319
    %v1321 = vand.u32 %v612, 4294901760
    %v1322 = vsub.f32 %v612, %v1321
    %1323 = vmatpush1.msra.mxu0 %v1322
    %v1324 = vand.u32 %v615, 4294901760
    %v1325 = vsub.f32 %v615, %v1324
    %1326 = vmatprep.subr.mxu0 %v1325
    %v1327 = vand.u32 %v614, 4294901760
    %v1328 = vsub.f32 %v614, %v1327
    %1329 = vmatpush1.msra.mxu0 %v1328
    %v1330 = vand.u32 %v617, 4294901760
    %v1331 = vsub.f32 %v617, %v1330
    %1332 = vmatprep.subr.mxu0 %v1331
    %v1333 = vand.u32 %v616, 4294901760
    %v1334 = vsub.f32 %v616, %v1333
    %1335 = vmatpush1.msra.mxu0 %v1334
    %v1336 = vand.u32 %v619, 4294901760
    %v1337 = vsub.f32 %v619, %v1336
    %1338 = vmatprep.subr.mxu0 %v1337
    %v1339 = vand.u32 %v618, 4294901760
    %v1340 = vsub.f32 %v618, %v1339
    %1341 = vmatpush1.msra.mxu0 %v1340
    %v1342 = vand.u32 %v621, 4294901760
    %v1343 = vsub.f32 %v621, %v1342
    %1344 = vmatprep.subr.mxu0 %v1343
    %v1345 = vand.u32 %v620, 4294901760
    %v1346 = vsub.f32 %v620, %v1345
    %1347 = vmatpush1.msra.mxu0 %v1346
    %v1348 = vand.u32 %v623, 4294901760
    %v1349 = vsub.f32 %v623, %v1348
    %1350 = vmatprep.subr.mxu0 %v1349
    %v1351 = vand.u32 %v622, 4294901760
    %v1352 = vsub.f32 %v622, %v1351
    %1353 = vmatpush1.msra.mxu0 %v1352
    %v1354 = vand.u32 %v625, 4294901760
    %v1355 = vsub.f32 %v625, %v1354
    %1356 = vmatprep.subr.mxu0 %v1355
    %v1357 = vand.u32 %v624, 4294901760
    %v1358 = vsub.f32 %v624, %v1357
    %1359 = vmatpush1.msra.mxu0 %v1358
    %v1360 = vand.u32 %v627, 4294901760
    %v1361 = vsub.f32 %v627, %v1360
    %1362 = vmatprep.subr.mxu0 %v1361
    %v1363 = vand.u32 %v626, 4294901760
    %v1364 = vsub.f32 %v626, %v1363
    %1365 = vmatpush1.msra.mxu0 %v1364
    %v1366 = vand.u32 %v629, 4294901760
    %v1367 = vsub.f32 %v629, %v1366
    %1368 = vmatprep.subr.mxu0 %v1367
    %v1369 = vand.u32 %v628, 4294901760
    %v1370 = vsub.f32 %v628, %v1369
    %1371 = vmatpush1.msra.mxu0 %v1370
    %v1372 = vand.u32 %v565, 4294901760
    %v1373 = vsub.f32 %v565, %v1372
    %1374 = vmatprep.mubr.f32.mxu0 %v1373
    %v1375 = vand.u32 %v564, 4294901760
    %v1376 = vsub.f32 %v564, %v1375
    %1377 = vmatmul.mubr.f32.gmra.mrb[0].mxu0 %v1376
    %v1378 = vpop.f32.mrb[0].mxu0
    %v1379 = vadd.f32 %v1176, %v1378
    %v1380 = vpop.f32.mrb[0].mxu0
    %v1381 = vadd.f32 %v1178, %v1380
    %1382 = vdwg.mxu0
    %v1383 = vand.u32 %v567, 4294901760
    %1384 = vmatprep.subr.mxu0 %v1383
    %v1385 = vand.u32 %v566, 4294901760
    %1386 = vmatpush1.msra.mxu0 %v1385
    %v1387 = vand.u32 %v569, 4294901760
    %1388 = vmatprep.subr.mxu0 %v1387
    %v1389 = vand.u32 %v568, 4294901760
    %1390 = vmatpush1.msra.mxu0 %v1389
    %v1391 = vand.u32 %v571, 4294901760
    %1392 = vmatprep.subr.mxu0 %v1391
    %v1393 = vand.u32 %v570, 4294901760
    %1394 = vmatpush1.msra.mxu0 %v1393
    %v1395 = vand.u32 %v573, 4294901760
    %1396 = vmatprep.subr.mxu0 %v1395
    %v1397 = vand.u32 %v572, 4294901760
    %1398 = vmatpush1.msra.mxu0 %v1397
    %v1399 = vand.u32 %v575, 4294901760
    %1400 = vmatprep.subr.mxu0 %v1399
    %v1401 = vand.u32 %v574, 4294901760
    %1402 = vmatpush1.msra.mxu0 %v1401
    %v1403 = vand.u32 %v577, 4294901760
    %1404 = vmatprep.subr.mxu0 %v1403
    %v1405 = vand.u32 %v576, 4294901760
    %1406 = vmatpush1.msra.mxu0 %v1405
    %v1407 = vand.u32 %v579, 4294901760
    %1408 = vmatprep.subr.mxu0 %v1407
    %v1409 = vand.u32 %v578, 4294901760
    %1410 = vmatpush1.msra.mxu0 %v1409
    %v1411 = vand.u32 %v581, 4294901760
    %1412 = vmatprep.subr.mxu0 %v1411
    %v1413 = vand.u32 %v580, 4294901760
    %1414 = vmatpush1.msra.mxu0 %v1413
    %v1415 = vand.u32 %v583, 4294901760
    %1416 = vmatprep.subr.mxu0 %v1415
    %v1417 = vand.u32 %v582, 4294901760
    %1418 = vmatpush1.msra.mxu0 %v1417
    %v1419 = vand.u32 %v585, 4294901760
    %1420 = vmatprep.subr.mxu0 %v1419
    %v1421 = vand.u32 %v584, 4294901760
    %1422 = vmatpush1.msra.mxu0 %v1421
    %v1423 = vand.u32 %v587, 4294901760
    %1424 = vmatprep.subr.mxu0 %v1423
    %v1425 = vand.u32 %v586, 4294901760
    %1426 = vmatpush1.msra.mxu0 %v1425
    %v1427 = vand.u32 %v589, 4294901760
    %1428 = vmatprep.subr.mxu0 %v1427
    %v1429 = vand.u32 %v588, 4294901760
    %1430 = vmatpush1.msra.mxu0 %v1429
    %v1431 = vand.u32 %v591, 4294901760
    %1432 = vmatprep.subr.mxu0 %v1431
    %v1433 = vand.u32 %v590, 4294901760
    %1434 = vmatpush1.msra.mxu0 %v1433
    %v1435 = vand.u32 %v593, 4294901760
    %1436 = vmatprep.subr.mxu0 %v1435
    %v1437 = vand.u32 %v592, 4294901760
    %1438 = vmatpush1.msra.mxu0 %v1437
    %v1439 = vand.u32 %v595, 4294901760
    %1440 = vmatprep.subr.mxu0 %v1439
    %v1441 = vand.u32 %v594, 4294901760
    %1442 = vmatpush1.msra.mxu0 %v1441
    %v1443 = vand.u32 %v597, 4294901760
    %1444 = vmatprep.subr.mxu0 %v1443
    %v1445 = vand.u32 %v596, 4294901760
    %1446 = vmatpush1.msra.mxu0 %v1445
    %v1447 = vand.u32 %v599, 4294901760
    %1448 = vmatprep.subr.mxu0 %v1447
    %v1449 = vand.u32 %v598, 4294901760
    %1450 = vmatpush1.msra.mxu0 %v1449
    %v1451 = vand.u32 %v601, 4294901760
    %1452 = vmatprep.subr.mxu0 %v1451
    %v1453 = vand.u32 %v600, 4294901760
    %1454 = vmatpush1.msra.mxu0 %v1453
    %v1455 = vand.u32 %v603, 4294901760
    %1456 = vmatprep.subr.mxu0 %v1455
    %v1457 = vand.u32 %v602, 4294901760
    %1458 = vmatpush1.msra.mxu0 %v1457
    %v1459 = vand.u32 %v605, 4294901760
    %1460 = vmatprep.subr.mxu0 %v1459
    %v1461 = vand.u32 %v604, 4294901760
    %1462 = vmatpush1.msra.mxu0 %v1461
    %v1463 = vand.u32 %v607, 4294901760
    %1464 = vmatprep.subr.mxu0 %v1463
    %v1465 = vand.u32 %v606, 4294901760
    %1466 = vmatpush1.msra.mxu0 %v1465
    %v1467 = vand.u32 %v609, 4294901760
    %1468 = vmatprep.subr.mxu0 %v1467
    %v1469 = vand.u32 %v608, 4294901760
    %1470 = vmatpush1.msra.mxu0 %v1469
    %v1471 = vand.u32 %v611, 4294901760
    %1472 = vmatprep.subr.mxu0 %v1471
    %v1473 = vand.u32 %v610, 4294901760
    %1474 = vmatpush1.msra.mxu0 %v1473
    %v1475 = vand.u32 %v613, 4294901760
    %1476 = vmatprep.subr.mxu0 %v1475
    %v1477 = vand.u32 %v612, 4294901760
    %1478 = vmatpush1.msra.mxu0 %v1477
    %v1479 = vand.u32 %v615, 4294901760
    %1480 = vmatprep.subr.mxu0 %v1479
    %v1481 = vand.u32 %v614, 4294901760
    %1482 = vmatpush1.msra.mxu0 %v1481
    %v1483 = vand.u32 %v617, 4294901760
    %1484 = vmatprep.subr.mxu0 %v1483
    %v1485 = vand.u32 %v616, 4294901760
    %1486 = vmatpush1.msra.mxu0 %v1485
    %v1487 = vand.u32 %v619, 4294901760
    %1488 = vmatprep.subr.mxu0 %v1487
    %v1489 = vand.u32 %v618, 4294901760
    %1490 = vmatpush1.msra.mxu0 %v1489
    %v1491 = vand.u32 %v621, 4294901760
    %1492 = vmatprep.subr.mxu0 %v1491
    %v1493 = vand.u32 %v620, 4294901760
    %1494 = vmatpush1.msra.mxu0 %v1493
    %v1495 = vand.u32 %v623, 4294901760
    %1496 = vmatprep.subr.mxu0 %v1495
    %v1497 = vand.u32 %v622, 4294901760
    %1498 = vmatpush1.msra.mxu0 %v1497
    %v1499 = vand.u32 %v625, 4294901760
    %1500 = vmatprep.subr.mxu0 %v1499
    %v1501 = vand.u32 %v624, 4294901760
    %1502 = vmatpush1.msra.mxu0 %v1501
    %v1503 = vand.u32 %v627, 4294901760
    %1504 = vmatprep.subr.mxu0 %v1503
    %v1505 = vand.u32 %v626, 4294901760
    %1506 = vmatpush1.msra.mxu0 %v1505
    %v1507 = vand.u32 %v629, 4294901760
    %1508 = vmatprep.subr.mxu0 %v1507
    %v1509 = vand.u32 %v628, 4294901760
    %1510 = vmatpush1.msra.mxu0 %v1509
    %v1511 = vand.u32 %v565, 4294901760
    %v1512 = vsub.f32 %v565, %v1511
    %v1513 = vand.u32 %v1512, 4294901760
    %1514 = vmatprep.mubr.f32.mxu0 %v1513
    %v1515 = vand.u32 %v564, 4294901760
    %v1516 = vsub.f32 %v564, %v1515
    %v1517 = vand.u32 %v1516, 4294901760
    %1518 = vmatmul.mubr.f32.gmra.mrb[0].mxu0 %v1517
    %v1519 = vpop.f32.mrb[0].mxu0
    %v1520 = vadd.f32 %v1379, %v1519
    %v1521 = vpop.f32.mrb[0].mxu0
    %v1522 = vadd.f32 %v1381, %v1521
    %1523 = vdwg.mxu0
    %v1524 = vand.u32 %v567, 4294901760
    %v1525 = vsub.f32 %v567, %v1524
    %v1526 = vand.u32 %v1525, 4294901760
    %1527 = vmatprep.subr.mxu0 %v1526
    %v1528 = vand.u32 %v566, 4294901760
    %v1529 = vsub.f32 %v566, %v1528
    %v1530 = vand.u32 %v1529, 4294901760
    %1531 = vmatpush1.msra.mxu0 %v1530
    %v1532 = vand.u32 %v569, 4294901760
    %v1533 = vsub.f32 %v569, %v1532
    %v1534 = vand.u32 %v1533, 4294901760
    %1535 = vmatprep.subr.mxu0 %v1534
    %v1536 = vand.u32 %v568, 4294901760
    %v1537 = vsub.f32 %v568, %v1536
    %v1538 = vand.u32 %v1537, 4294901760
    %1539 = vmatpush1.msra.mxu0 %v1538
    %v1540 = vand.u32 %v571, 4294901760
    %v1541 = vsub.f32 %v571, %v1540
    %v1542 = vand.u32 %v1541, 4294901760
    %1543 = vmatprep.subr.mxu0 %v1542
    %v1544 = vand.u32 %v570, 4294901760
    %v1545 = vsub.f32 %v570, %v1544
    %v1546 = vand.u32 %v1545, 4294901760
    %1547 = vmatpush1.msra.mxu0 %v1546
    %v1548 = vand.u32 %v573, 4294901760
    %v1549 = vsub.f32 %v573, %v1548
    %v1550 = vand.u32 %v1549, 4294901760
    %1551 = vmatprep.subr.mxu0 %v1550
    %v1552 = vand.u32 %v572, 4294901760
    %v1553 = vsub.f32 %v572, %v1552
    %v1554 = vand.u32 %v1553, 4294901760
    %1555 = vmatpush1.msra.mxu0 %v1554
    %v1556 = vand.u32 %v575, 4294901760
    %v1557 = vsub.f32 %v575, %v1556
    %v1558 = vand.u32 %v1557, 4294901760
    %1559 = vmatprep.subr.mxu0 %v1558
    %v1560 = vand.u32 %v574, 4294901760
    %v1561 = vsub.f32 %v574, %v1560
    %v1562 = vand.u32 %v1561, 4294901760
    %1563 = vmatpush1.msra.mxu0 %v1562
    %v1564 = vand.u32 %v577, 4294901760
    %v1565 = vsub.f32 %v577, %v1564
    %v1566 = vand.u32 %v1565, 4294901760
    %1567 = vmatprep.subr.mxu0 %v1566
    %v1568 = vand.u32 %v576, 4294901760
    %v1569 = vsub.f32 %v576, %v1568
    %v1570 = vand.u32 %v1569, 4294901760
    %1571 = vmatpush1.msra.mxu0 %v1570
    %v1572 = vand.u32 %v579, 4294901760
    %v1573 = vsub.f32 %v579, %v1572
    %v1574 = vand.u32 %v1573, 4294901760
    %1575 = vmatprep.subr.mxu0 %v1574
    %v1576 = vand.u32 %v578, 4294901760
    %v1577 = vsub.f32 %v578, %v1576
    %v1578 = vand.u32 %v1577, 4294901760
    %1579 = vmatpush1.msra.mxu0 %v1578
    %v1580 = vand.u32 %v581, 4294901760
    %v1581 = vsub.f32 %v581, %v1580
    %v1582 = vand.u32 %v1581, 4294901760
    %1583 = vmatprep.subr.mxu0 %v1582
    %v1584 = vand.u32 %v580, 4294901760
    %v1585 = vsub.f32 %v580, %v1584
    %v1586 = vand.u32 %v1585, 4294901760
    %1587 = vmatpush1.msra.mxu0 %v1586
    %v1588 = vand.u32 %v583, 4294901760
    %v1589 = vsub.f32 %v583, %v1588
    %v1590 = vand.u32 %v1589, 4294901760
    %1591 = vmatprep.subr.mxu0 %v1590
    %v1592 = vand.u32 %v582, 4294901760
    %v1593 = vsub.f32 %v582, %v1592
    %v1594 = vand.u32 %v1593, 4294901760
    %1595 = vmatpush1.msra.mxu0 %v1594
    %v1596 = vand.u32 %v585, 4294901760
    %v1597 = vsub.f32 %v585, %v1596
    %v1598 = vand.u32 %v1597, 4294901760
    %1599 = vmatprep.subr.mxu0 %v1598
    %v1600 = vand.u32 %v584, 4294901760
    %v1601 = vsub.f32 %v584, %v1600
    %v1602 = vand.u32 %v1601, 4294901760
    %1603 = vmatpush1.msra.mxu0 %v1602
    %v1604 = vand.u32 %v587, 4294901760
    %v1605 = vsub.f32 %v587, %v1604
    %v1606 = vand.u32 %v1605, 4294901760
    %1607 = vmatprep.subr.mxu0 %v1606
    %v1608 = vand.u32 %v586, 4294901760
    %v1609 = vsub.f32 %v586, %v1608
    %v1610 = vand.u32 %v1609, 4294901760
    %1611 = vmatpush1.msra.mxu0 %v1610
    %v1612 = vand.u32 %v589, 4294901760
    %v1613 = vsub.f32 %v589, %v1612
    %v1614 = vand.u32 %v1613, 4294901760
    %1615 = vmatprep.subr.mxu0 %v1614
    %v1616 = vand.u32 %v588, 4294901760
    %v1617 = vsub.f32 %v588, %v1616
    %v1618 = vand.u32 %v1617, 4294901760
    %1619 = vmatpush1.msra.mxu0 %v1618
    %v1620 = vand.u32 %v591, 4294901760
    %v1621 = vsub.f32 %v591, %v1620
    %v1622 = vand.u32 %v1621, 4294901760
    %1623 = vmatprep.subr.mxu0 %v1622
    %v1624 = vand.u32 %v590, 4294901760
    %v1625 = vsub.f32 %v590, %v1624
    %v1626 = vand.u32 %v1625, 4294901760
    %1627 = vmatpush1.msra.mxu0 %v1626
    %v1628 = vand.u32 %v593, 4294901760
    %v1629 = vsub.f32 %v593, %v1628
    %v1630 = vand.u32 %v1629, 4294901760
    %1631 = vmatprep.subr.mxu0 %v1630
    %v1632 = vand.u32 %v592, 4294901760
    %v1633 = vsub.f32 %v592, %v1632
    %v1634 = vand.u32 %v1633, 4294901760
    %1635 = vmatpush1.msra.mxu0 %v1634
    %v1636 = vand.u32 %v595, 4294901760
    %v1637 = vsub.f32 %v595, %v1636
    %v1638 = vand.u32 %v1637, 4294901760
    %1639 = vmatprep.subr.mxu0 %v1638
    %v1640 = vand.u32 %v594, 4294901760
    %v1641 = vsub.f32 %v594, %v1640
    %v1642 = vand.u32 %v1641, 4294901760
    %1643 = vmatpush1.msra.mxu0 %v1642
    %v1644 = vand.u32 %v597, 4294901760
    %v1645 = vsub.f32 %v597, %v1644
    %v1646 = vand.u32 %v1645, 4294901760
    %1647 = vmatprep.subr.mxu0 %v1646
    %v1648 = vand.u32 %v596, 4294901760
    %v1649 = vsub.f32 %v596, %v1648
    %v1650 = vand.u32 %v1649, 4294901760
    %1651 = vmatpush1.msra.mxu0 %v1650
    %v1652 = vand.u32 %v599, 4294901760
    %v1653 = vsub.f32 %v599, %v1652
    %v1654 = vand.u32 %v1653, 4294901760
    %1655 = vmatprep.subr.mxu0 %v1654
    %v1656 = vand.u32 %v598, 4294901760
    %v1657 = vsub.f32 %v598, %v1656
    %v1658 = vand.u32 %v1657, 4294901760
    %1659 = vmatpush1.msra.mxu0 %v1658
    %v1660 = vand.u32 %v601, 4294901760
    %v1661 = vsub.f32 %v601, %v1660
    %v1662 = vand.u32 %v1661, 4294901760
    %1663 = vmatprep.subr.mxu0 %v1662
    %v1664 = vand.u32 %v600, 4294901760
    %v1665 = vsub.f32 %v600, %v1664
    %v1666 = vand.u32 %v1665, 4294901760
    %1667 = vmatpush1.msra.mxu0 %v1666
    %v1668 = vand.u32 %v603, 4294901760
    %v1669 = vsub.f32 %v603, %v1668
    %v1670 = vand.u32 %v1669, 4294901760
    %1671 = vmatprep.subr.mxu0 %v1670
    %v1672 = vand.u32 %v602, 4294901760
    %v1673 = vsub.f32 %v602, %v1672
    %v1674 = vand.u32 %v1673, 4294901760
    %1675 = vmatpush1.msra.mxu0 %v1674
    %v1676 = vand.u32 %v605, 4294901760
    %v1677 = vsub.f32 %v605, %v1676
    %v1678 = vand.u32 %v1677, 4294901760
    %1679 = vmatprep.subr.mxu0 %v1678
    %v1680 = vand.u32 %v604, 4294901760
    %v1681 = vsub.f32 %v604, %v1680
    %v1682 = vand.u32 %v1681, 4294901760
    %1683 = vmatpush1.msra.mxu0 %v1682
    %v1684 = vand.u32 %v607, 4294901760
    %v1685 = vsub.f32 %v607, %v1684
    %v1686 = vand.u32 %v1685, 4294901760
    %1687 = vmatprep.subr.mxu0 %v1686
    %v1688 = vand.u32 %v606, 4294901760
    %v1689 = vsub.f32 %v606, %v1688
    %v1690 = vand.u32 %v1689, 4294901760
    %1691 = vmatpush1.msra.mxu0 %v1690
    %v1692 = vand.u32 %v609, 4294901760
    %v1693 = vsub.f32 %v609, %v1692
    %v1694 = vand.u32 %v1693, 4294901760
    %1695 = vmatprep.subr.mxu0 %v1694
    %v1696 = vand.u32 %v608, 4294901760
    %v1697 = vsub.f32 %v608, %v1696
    %v1698 = vand.u32 %v1697, 4294901760
    %1699 = vmatpush1.msra.mxu0 %v1698
    %v1700 = vand.u32 %v611, 4294901760
    %v1701 = vsub.f32 %v611, %v1700
    %v1702 = vand.u32 %v1701, 4294901760
    %1703 = vmatprep.subr.mxu0 %v1702
    %v1704 = vand.u32 %v610, 4294901760
    %v1705 = vsub.f32 %v610, %v1704
    %v1706 = vand.u32 %v1705, 4294901760
    %1707 = vmatpush1.msra.mxu0 %v1706
    %v1708 = vand.u32 %v613, 4294901760
    %v1709 = vsub.f32 %v613, %v1708
    %v1710 = vand.u32 %v1709, 4294901760
    %1711 = vmatprep.subr.mxu0 %v1710
    %v1712 = vand.u32 %v612, 4294901760
    %v1713 = vsub.f32 %v612, %v1712
    %v1714 = vand.u32 %v1713, 4294901760
    %1715 = vmatpush1.msra.mxu0 %v1714
    %v1716 = vand.u32 %v615, 4294901760
    %v1717 = vsub.f32 %v615, %v1716
    %v1718 = vand.u32 %v1717, 4294901760
    %1719 = vmatprep.subr.mxu0 %v1718
    %v1720 = vand.u32 %v614, 4294901760
    %v1721 = vsub.f32 %v614, %v1720
    %v1722 = vand.u32 %v1721, 4294901760
    %1723 = vmatpush1.msra.mxu0 %v1722
    %v1724 = vand.u32 %v617, 4294901760
    %v1725 = vsub.f32 %v617, %v1724
    %v1726 = vand.u32 %v1725, 4294901760
    %1727 = vmatprep.subr.mxu0 %v1726
    %v1728 = vand.u32 %v616, 4294901760
    %v1729 = vsub.f32 %v616, %v1728
    %v1730 = vand.u32 %v1729, 4294901760
    %1731 = vmatpush1.msra.mxu0 %v1730
    %v1732 = vand.u32 %v619, 4294901760
    %v1733 = vsub.f32 %v619, %v1732
    %v1734 = vand.u32 %v1733, 4294901760
    %1735 = vmatprep.subr.mxu0 %v1734
    %v1736 = vand.u32 %v618, 4294901760
    %v1737 = vsub.f32 %v618, %v1736
    %v1738 = vand.u32 %v1737, 4294901760
    %1739 = vmatpush1.msra.mxu0 %v1738
    %v1740 = vand.u32 %v621, 4294901760
    %v1741 = vsub.f32 %v621, %v1740
    %v1742 = vand.u32 %v1741, 4294901760
    %1743 = vmatprep.subr.mxu0 %v1742
    %v1744 = vand.u32 %v620, 4294901760
    %v1745 = vsub.f32 %v620, %v1744
    %v1746 = vand.u32 %v1745, 4294901760
    %1747 = vmatpush1.msra.mxu0 %v1746
    %v1748 = vand.u32 %v623, 4294901760
    %v1749 = vsub.f32 %v623, %v1748
    %v1750 = vand.u32 %v1749, 4294901760
    %1751 = vmatprep.subr.mxu0 %v1750
    %v1752 = vand.u32 %v622, 4294901760
    %v1753 = vsub.f32 %v622, %v1752
    %v1754 = vand.u32 %v1753, 4294901760
    %1755 = vmatpush1.msra.mxu0 %v1754
    %v1756 = vand.u32 %v625, 4294901760
    %v1757 = vsub.f32 %v625, %v1756
    %v1758 = vand.u32 %v1757, 4294901760
    %1759 = vmatprep.subr.mxu0 %v1758
    %v1760 = vand.u32 %v624, 4294901760
    %v1761 = vsub.f32 %v624, %v1760
    %v1762 = vand.u32 %v1761, 4294901760
    %1763 = vmatpush1.msra.mxu0 %v1762
    %v1764 = vand.u32 %v627, 4294901760
    %v1765 = vsub.f32 %v627, %v1764
    %v1766 = vand.u32 %v1765, 4294901760
    %1767 = vmatprep.subr.mxu0 %v1766
    %v1768 = vand.u32 %v626, 4294901760
    %v1769 = vsub.f32 %v626, %v1768
    %v1770 = vand.u32 %v1769, 4294901760
    %1771 = vmatpush1.msra.mxu0 %v1770
    %v1772 = vand.u32 %v629, 4294901760
    %v1773 = vsub.f32 %v629, %v1772
    %v1774 = vand.u32 %v1773, 4294901760
    %1775 = vmatprep.subr.mxu0 %v1774
    %v1776 = vand.u32 %v628, 4294901760
    %v1777 = vsub.f32 %v628, %v1776
    %v1778 = vand.u32 %v1777, 4294901760
    %1779 = vmatpush1.msra.mxu0 %v1778
    %v1780 = vand.u32 %v565, 4294901760
    %1781 = vmatprep.mubr.f32.mxu0 %v1780
    %v1782 = vand.u32 %v564, 4294901760
    %1783 = vmatmul.mubr.f32.gmra.mrb[0].mxu0 %v1782
    %v1784 = vpop.f32.mrb[0].mxu0
    %v1785 = vadd.f32 %v1520, %v1784
    %v1786 = vpop.f32.mrb[0].mxu0
    %v1787 = vadd.f32 %v1522, %v1786
    %1788 = vdwg.mxu0
    %v1789 = vand.u32 %v567, 4294901760
    %1790 = vmatprep.subr.mxu0 %v1789
    %v1791 = vand.u32 %v566, 4294901760
    %1792 = vmatpush1.msra.mxu0 %v1791
    %v1793 = vand.u32 %v569, 4294901760
    %1794 = vmatprep.subr.mxu0 %v1793
    %v1795 = vand.u32 %v568, 4294901760
    %1796 = vmatpush1.msra.mxu0 %v1795
    %v1797 = vand.u32 %v571, 4294901760
    %1798 = vmatprep.subr.mxu0 %v1797
    %v1799 = vand.u32 %v570, 4294901760
    %1800 = vmatpush1.msra.mxu0 %v1799
    %v1801 = vand.u32 %v573, 4294901760
    %1802 = vmatprep.subr.mxu0 %v1801
    %v1803 = vand.u32 %v572, 4294901760
    %1804 = vmatpush1.msra.mxu0 %v1803
    %v1805 = vand.u32 %v575, 4294901760
    %1806 = vmatprep.subr.mxu0 %v1805
    %v1807 = vand.u32 %v574, 4294901760
    %1808 = vmatpush1.msra.mxu0 %v1807
    %v1809 = vand.u32 %v577, 4294901760
    %1810 = vmatprep.subr.mxu0 %v1809
    %v1811 = vand.u32 %v576, 4294901760
    %1812 = vmatpush1.msra.mxu0 %v1811
    %v1813 = vand.u32 %v579, 4294901760
    %1814 = vmatprep.subr.mxu0 %v1813
    %v1815 = vand.u32 %v578, 4294901760
    %1816 = vmatpush1.msra.mxu0 %v1815
    %v1817 = vand.u32 %v581, 4294901760
    %1818 = vmatprep.subr.mxu0 %v1817
    %v1819 = vand.u32 %v580, 4294901760
    %1820 = vmatpush1.msra.mxu0 %v1819
    %v1821 = vand.u32 %v583, 4294901760
    %1822 = vmatprep.subr.mxu0 %v1821
    %v1823 = vand.u32 %v582, 4294901760
    %1824 = vmatpush1.msra.mxu0 %v1823
    %v1825 = vand.u32 %v585, 4294901760
    %1826 = vmatprep.subr.mxu0 %v1825
    %v1827 = vand.u32 %v584, 4294901760
    %1828 = vmatpush1.msra.mxu0 %v1827
    %v1829 = vand.u32 %v587, 4294901760
    %1830 = vmatprep.subr.mxu0 %v1829
    %v1831 = vand.u32 %v586, 4294901760
    %1832 = vmatpush1.msra.mxu0 %v1831
    %v1833 = vand.u32 %v589, 4294901760
    %1834 = vmatprep.subr.mxu0 %v1833
    %v1835 = vand.u32 %v588, 4294901760
    %1836 = vmatpush1.msra.mxu0 %v1835
    %v1837 = vand.u32 %v591, 4294901760
    %1838 = vmatprep.subr.mxu0 %v1837
    %v1839 = vand.u32 %v590, 4294901760
    %1840 = vmatpush1.msra.mxu0 %v1839
    %v1841 = vand.u32 %v593, 4294901760
    %1842 = vmatprep.subr.mxu0 %v1841
    %v1843 = vand.u32 %v592, 4294901760
    %1844 = vmatpush1.msra.mxu0 %v1843
    %v1845 = vand.u32 %v595, 4294901760
    %1846 = vmatprep.subr.mxu0 %v1845
    %v1847 = vand.u32 %v594, 4294901760
    %1848 = vmatpush1.msra.mxu0 %v1847
    %v1849 = vand.u32 %v597, 4294901760
    %1850 = vmatprep.subr.mxu0 %v1849
    %v1851 = vand.u32 %v596, 4294901760
    %1852 = vmatpush1.msra.mxu0 %v1851
    %v1853 = vand.u32 %v599, 4294901760
    %1854 = vmatprep.subr.mxu0 %v1853
    %v1855 = vand.u32 %v598, 4294901760
    %1856 = vmatpush1.msra.mxu0 %v1855
    %v1857 = vand.u32 %v601, 4294901760
    %1858 = vmatprep.subr.mxu0 %v1857
    %v1859 = vand.u32 %v600, 4294901760
    %1860 = vmatpush1.msra.mxu0 %v1859
    %v1861 = vand.u32 %v603, 4294901760
    %1862 = vmatprep.subr.mxu0 %v1861
    %v1863 = vand.u32 %v602, 4294901760
    %1864 = vmatpush1.msra.mxu0 %v1863
    %v1865 = vand.u32 %v605, 4294901760
    %1866 = vmatprep.subr.mxu0 %v1865
    %v1867 = vand.u32 %v604, 4294901760
    %1868 = vmatpush1.msra.mxu0 %v1867
    %v1869 = vand.u32 %v607, 4294901760
    %1870 = vmatprep.subr.mxu0 %v1869
    %v1871 = vand.u32 %v606, 4294901760
    %1872 = vmatpush1.msra.mxu0 %v1871
    %v1873 = vand.u32 %v609, 4294901760
    %1874 = vmatprep.subr.mxu0 %v1873
    %v1875 = vand.u32 %v608, 4294901760
    %1876 = vmatpush1.msra.mxu0 %v1875
    %v1877 = vand.u32 %v611, 4294901760
    %1878 = vmatprep.subr.mxu0 %v1877
    %v1879 = vand.u32 %v610, 4294901760
    %1880 = vmatpush1.msra.mxu0 %v1879
    %v1881 = vand.u32 %v613, 4294901760
    %1882 = vmatprep.subr.mxu0 %v1881
    %v1883 = vand.u32 %v612, 4294901760
    %1884 = vmatpush1.msra.mxu0 %v1883
    %v1885 = vand.u32 %v615, 4294901760
    %1886 = vmatprep.subr.mxu0 %v1885
    %v1887 = vand.u32 %v614, 4294901760
    %1888 = vmatpush1.msra.mxu0 %v1887
    %v1889 = vand.u32 %v617, 4294901760
    %1890 = vmatprep.subr.mxu0 %v1889
    %v1891 = vand.u32 %v616, 4294901760
    %1892 = vmatpush1.msra.mxu0 %v1891
    %v1893 = vand.u32 %v619, 4294901760
    %1894 = vmatprep.subr.mxu0 %v1893
    %v1895 = vand.u32 %v618, 4294901760
    %1896 = vmatpush1.msra.mxu0 %v1895
    %v1897 = vand.u32 %v621, 4294901760
    %1898 = vmatprep.subr.mxu0 %v1897
    %v1899 = vand.u32 %v620, 4294901760
    %1900 = vmatpush1.msra.mxu0 %v1899
    %v1901 = vand.u32 %v623, 4294901760
    %1902 = vmatprep.subr.mxu0 %v1901
    %v1903 = vand.u32 %v622, 4294901760
    %1904 = vmatpush1.msra.mxu0 %v1903
    %v1905 = vand.u32 %v625, 4294901760
    %1906 = vmatprep.subr.mxu0 %v1905
    %v1907 = vand.u32 %v624, 4294901760
    %1908 = vmatpush1.msra.mxu0 %v1907
    %v1909 = vand.u32 %v627, 4294901760
    %1910 = vmatprep.subr.mxu0 %v1909
    %v1911 = vand.u32 %v626, 4294901760
    %1912 = vmatpush1.msra.mxu0 %v1911
    %v1913 = vand.u32 %v629, 4294901760
    %1914 = vmatprep.subr.mxu0 %v1913
    %v1915 = vand.u32 %v628, 4294901760
    %1916 = vmatpush1.msra.mxu0 %v1915
    %v1917 = vand.u32 %v565, 4294901760
    %1918 = vmatprep.mubr.f32.mxu0 %v1917
    %v1919 = vand.u32 %v564, 4294901760
    %1920 = vmatmul.mubr.f32.gmra.mrb[0].mxu0 %v1919
    %v1921 = vpop.f32.mrb[0].mxu0
    %v1922 = vadd.f32 %v1785, %v1921
    %v1923 = vpop.f32.mrb[0].mxu0
    %v1924 = vadd.f32 %v1787, %v1923
    %1925 = vdwg.mxu0
    %v1926 = vmax.f32 %v1922, 0.0
    %v1927 = vmax.f32 %v1924, 0.0
    %v1928 = vld [vmem:[#allocation8] sm:$0xff]
    %v1929 = vld [vmem:[#allocation8 + $0x8] sm:$0xff]
    %v1930 = vld [vmem:[#allocation8 + $0x10] sm:$0xff]
    %v1931 = vld [vmem:[#allocation8 + $0x18] sm:$0xff]
    %v1932 = vld [vmem:[#allocation8 + $0x20] sm:$0xff]
    %v1933 = vld [vmem:[#allocation8 + $0x28] sm:$0xff]
    %v1934 = vld [vmem:[#allocation8 + $0x30] sm:$0xff]
    %v1935 = vld [vmem:[#allocation8 + $0x38] sm:$0xff]
    %v1936 = vld [vmem:[#allocation8 + $0x40] sm:$0xff]
    %v1937 = vld [vmem:[#allocation8 + $0x48] sm:$0xff]
    %v1938 = vld [vmem:[#allocation8 + $0x50] sm:$0xff]
    %v1939 = vld [vmem:[#allocation8 + $0x58] sm:$0xff]
    %v1940 = vld [vmem:[#allocation8 + $0x60] sm:$0xff]
    %v1941 = vld [vmem:[#allocation8 + $0x68] sm:$0xff]
    %v1942 = vld [vmem:[#allocation8 + $0x70] sm:$0xff]
    %v1943 = vld [vmem:[#allocation8 + $0x78] sm:$0xff]
    %v1944 = vld [vmem:[#allocation8 + $0x80] sm:$0xff]
    %v1945 = vld [vmem:[#allocation8 + $0x88] sm:$0xff]
    %v1946 = vld [vmem:[#allocation8 + $0x90] sm:$0xff]
    %v1947 = vld [vmem:[#allocation8 + $0x98] sm:$0xff]
    %v1948 = vld [vmem:[#allocation8 + $0xa0] sm:$0xff]
    %v1949 = vld [vmem:[#allocation8 + $0xa8] sm:$0xff]
    %v1950 = vld [vmem:[#allocation8 + $0xb0] sm:$0xff]
    %v1951 = vld [vmem:[#allocation8 + $0xb8] sm:$0xff]
    %v1952 = vld [vmem:[#allocation8 + $0xc0] sm:$0xff]
    %v1953 = vld [vmem:[#allocation8 + $0xc8] sm:$0xff]
    %v1954 = vld [vmem:[#allocation8 + $0xd0] sm:$0xff]
    %v1955 = vld [vmem:[#allocation8 + $0xd8] sm:$0xff]
    %v1956 = vld [vmem:[#allocation8 + $0xe0] sm:$0xff]
    %v1957 = vld [vmem:[#allocation8 + $0xe8] sm:$0xff]
    %v1958 = vld [vmem:[#allocation8 + $0xf0] sm:$0xff]
    %v1959 = vld [vmem:[#allocation8 + $0xf8] sm:$0xff]
    %v1960 = vld [vmem:[%s6] sm:$0x1]
    %v1962 = vlaneseq
    %v1963 = vshrl.u32 %v1962, 7
    %v1964 = vsub.s32 0, %v1963
    %v1965 = vrot.slane %v1960, %v1964
    %1967 = vmatprep.subr.mxu0 0.0
    %v1968 = vand.u32 %v1928, 4294901760
    %1969 = vmatpush1.msra.mxu0 %v1968
    %1970 = vmatprep.subr.mxu0 0.0
    %v1971 = vand.u32 %v1929, 4294901760
    %1972 = vmatpush1.msra.mxu0 %v1971
    %1973 = vmatprep.subr.mxu0 0.0
    %v1974 = vand.u32 %v1930, 4294901760
    %1975 = vmatpush1.msra.mxu0 %v1974
    %1976 = vmatprep.subr.mxu0 0.0
    %v1977 = vand.u32 %v1931, 4294901760
    %1978 = vmatpush1.msra.mxu0 %v1977
    %1979 = vmatprep.subr.mxu0 0.0
    %v1980 = vand.u32 %v1932, 4294901760
    %1981 = vmatpush1.msra.mxu0 %v1980
    %1982 = vmatprep.subr.mxu0 0.0
    %v1983 = vand.u32 %v1933, 4294901760
    %1984 = vmatpush1.msra.mxu0 %v1983
    %1985 = vmatprep.subr.mxu0 0.0
    %v1986 = vand.u32 %v1934, 4294901760
    %1987 = vmatpush1.msra.mxu0 %v1986
    %1988 = vmatprep.subr.mxu0 0.0
    %v1989 = vand.u32 %v1935, 4294901760
    %1990 = vmatpush1.msra.mxu0 %v1989
    %1991 = vmatprep.subr.mxu0 0.0
    %v1992 = vand.u32 %v1936, 4294901760
    %1993 = vmatpush1.msra.mxu0 %v1992
    %1994 = vmatprep.subr.mxu0 0.0
    %v1995 = vand.u32 %v1937, 4294901760
    %1996 = vmatpush1.msra.mxu0 %v1995
    %1997 = vmatprep.subr.mxu0 0.0
    %v1998 = vand.u32 %v1938, 4294901760
    %1999 = vmatpush1.msra.mxu0 %v1998
    %2000 = vmatprep.subr.mxu0 0.0
    %v2001 = vand.u32 %v1939, 4294901760
    %2002 = vmatpush1.msra.mxu0 %v2001
    %2003 = vmatprep.subr.mxu0 0.0
    %v2004 = vand.u32 %v1940, 4294901760
    %2005 = vmatpush1.msra.mxu0 %v2004
    %2006 = vmatprep.subr.mxu0 0.0
    %v2007 = vand.u32 %v1941, 4294901760
    %2008 = vmatpush1.msra.mxu0 %v2007
    %2009 = vmatprep.subr.mxu0 0.0
    %v2010 = vand.u32 %v1942, 4294901760
    %2011 = vmatpush1.msra.mxu0 %v2010
    %2012 = vmatprep.subr.mxu0 0.0
    %v2013 = vand.u32 %v1943, 4294901760
    %2014 = vmatpush1.msra.mxu0 %v2013
    %2015 = vmatprep.subr.mxu0 0.0
    %v2016 = vand.u32 %v1944, 4294901760
    %2017 = vmatpush1.msra.mxu0 %v2016
    %2018 = vmatprep.subr.mxu0 0.0
    %v2019 = vand.u32 %v1945, 4294901760
    %2020 = vmatpush1.msra.mxu0 %v2019
    %2021 = vmatprep.subr.mxu0 0.0
    %v2022 = vand.u32 %v1946, 4294901760
    %2023 = vmatpush1.msra.mxu0 %v2022
    %2024 = vmatprep.subr.mxu0 0.0
    %v2025 = vand.u32 %v1947, 4294901760
    %2026 = vmatpush1.msra.mxu0 %v2025
    %2027 = vmatprep.subr.mxu0 0.0
    %v2028 = vand.u32 %v1948, 4294901760
    %2029 = vmatpush1.msra.mxu0 %v2028
    %2030 = vmatprep.subr.mxu0 0.0
    %v2031 = vand.u32 %v1949, 4294901760
    %2032 = vmatpush1.msra.mxu0 %v2031
    %2033 = vmatprep.subr.mxu0 0.0
    %v2034 = vand.u32 %v1950, 4294901760
    %2035 = vmatpush1.msra.mxu0 %v2034
    %2036 = vmatprep.subr.mxu0 0.0
    %v2037 = vand.u32 %v1951, 4294901760
    %2038 = vmatpush1.msra.mxu0 %v2037
    %2039 = vmatprep.subr.mxu0 0.0
    %v2040 = vand.u32 %v1952, 4294901760
    %2041 = vmatpush1.msra.mxu0 %v2040
    %2042 = vmatprep.subr.mxu0 0.0
    %v2043 = vand.u32 %v1953, 4294901760
    %2044 = vmatpush1.msra.mxu0 %v2043
    %2045 = vmatprep.subr.mxu0 0.0
    %v2046 = vand.u32 %v1954, 4294901760
    %2047 = vmatpush1.msra.mxu0 %v2046
    %2048 = vmatprep.subr.mxu0 0.0
    %v2049 = vand.u32 %v1955, 4294901760
    %2050 = vmatpush1.msra.mxu0 %v2049
    %2051 = vmatprep.subr.mxu0 0.0
    %v2052 = vand.u32 %v1956, 4294901760
    %2053 = vmatpush1.msra.mxu0 %v2052
    %2054 = vmatprep.subr.mxu0 0.0
    %v2055 = vand.u32 %v1957, 4294901760
    %2056 = vmatpush1.msra.mxu0 %v2055
    %2057 = vmatprep.subr.mxu0 0.0
    %v2058 = vand.u32 %v1958, 4294901760
    %2059 = vmatpush1.msra.mxu0 %v2058
    %2060 = vmatprep.subr.mxu0 0.0
    %v2061 = vand.u32 %v1959, 4294901760
    %2062 = vmatpush1.msra.mxu0 %v2061
    %v2063 = vand.u32 %v1927, 4294901760
    %v2064 = vsub.f32 %v1927, %v2063
    %v2065 = vand.u32 %v2064, 4294901760
    %v2066 = vsub.f32 %v2064, %v2065
    %v2067 = vand.u32 %v2066, 4294901760
    %2068 = vmatprep.mubr.f32.mxu0 %v2067
    %v2069 = vand.u32 %v1926, 4294901760
    %v2070 = vsub.f32 %v1926, %v2069
    %v2071 = vand.u32 %v2070, 4294901760
    %v2072 = vsub.f32 %v2070, %v2071
    %v2073 = vand.u32 %v2072, 4294901760
    %2074 = vmatmul.mubr.f32.gmra.mrb[0].mxu0 %v2073
    %v2075 = vpop.f32.mrb[0].mxu0
    %v2076 = vadd.f32 %v1965, %v2075
    %v2077 = vpop.f32.mrb[0].mxu0
    %2078 = vdwg.mxu0
    %2079 = vmatprep.subr.mxu0 0.0
    %v2080 = vand.u32 %v1928, 4294901760
    %v2081 = vsub.f32 %v1928, %v2080
    %v2082 = vand.u32 %v2081, 4294901760
    %v2083 = vsub.f32 %v2081, %v2082
    %v2084 = vand.u32 %v2083, 4294901760
    %2085 = vmatpush1.msra.mxu0 %v2084
    %2086 = vmatprep.subr.mxu0 0.0
    %v2087 = vand.u32 %v1929, 4294901760
    %v2088 = vsub.f32 %v1929, %v2087
    %v2089 = vand.u32 %v2088, 4294901760
    %v2090 = vsub.f32 %v2088, %v2089
    %v2091 = vand.u32 %v2090, 4294901760
    %2092 = vmatpush1.msra.mxu0 %v2091
    %2093 = vmatprep.subr.mxu0 0.0
    %v2094 = vand.u32 %v1930, 4294901760
    %v2095 = vsub.f32 %v1930, %v2094
    %v2096 = vand.u32 %v2095, 4294901760
    %v2097 = vsub.f32 %v2095, %v2096
    %v2098 = vand.u32 %v2097, 4294901760
    %2099 = vmatpush1.msra.mxu0 %v2098
    %2100 = vmatprep.subr.mxu0 0.0
    %v2101 = vand.u32 %v1931, 4294901760
    %v2102 = vsub.f32 %v1931, %v2101
    %v2103 = vand.u32 %v2102, 4294901760
    %v2104 = vsub.f32 %v2102, %v2103
    %v2105 = vand.u32 %v2104, 4294901760
    %2106 = vmatpush1.msra.mxu0 %v2105
    %2107 = vmatprep.subr.mxu0 0.0
    %v2108 = vand.u32 %v1932, 4294901760
    %v2109 = vsub.f32 %v1932, %v2108
    %v2110 = vand.u32 %v2109, 4294901760
    %v2111 = vsub.f32 %v2109, %v2110
    %v2112 = vand.u32 %v2111, 4294901760
    %2113 = vmatpush1.msra.mxu0 %v2112
    %2114 = vmatprep.subr.mxu0 0.0
    %v2115 = vand.u32 %v1933, 4294901760
    %v2116 = vsub.f32 %v1933, %v2115
    %v2117 = vand.u32 %v2116, 4294901760
    %v2118 = vsub.f32 %v2116, %v2117
    %v2119 = vand.u32 %v2118, 4294901760
    %2120 = vmatpush1.msra.mxu0 %v2119
    %2121 = vmatprep.subr.mxu0 0.0
    %v2122 = vand.u32 %v1934, 4294901760
    %v2123 = vsub.f32 %v1934, %v2122
    %v2124 = vand.u32 %v2123, 4294901760
    %v2125 = vsub.f32 %v2123, %v2124
    %v2126 = vand.u32 %v2125, 4294901760
    %2127 = vmatpush1.msra.mxu0 %v2126
    %2128 = vmatprep.subr.mxu0 0.0
    %v2129 = vand.u32 %v1935, 4294901760
    %v2130 = vsub.f32 %v1935, %v2129
    %v2131 = vand.u32 %v2130, 4294901760
    %v2132 = vsub.f32 %v2130, %v2131
    %v2133 = vand.u32 %v2132, 4294901760
    %2134 = vmatpush1.msra.mxu0 %v2133
    %2135 = vmatprep.subr.mxu0 0.0
    %v2136 = vand.u32 %v1936, 4294901760
    %v2137 = vsub.f32 %v1936, %v2136
    %v2138 = vand.u32 %v2137, 4294901760
    %v2139 = vsub.f32 %v2137, %v2138
    %v2140 = vand.u32 %v2139, 4294901760
    %2141 = vmatpush1.msra.mxu0 %v2140
    %2142 = vmatprep.subr.mxu0 0.0
    %v2143 = vand.u32 %v1937, 4294901760
    %v2144 = vsub.f32 %v1937, %v2143
    %v2145 = vand.u32 %v2144, 4294901760
    %v2146 = vsub.f32 %v2144, %v2145
    %v2147 = vand.u32 %v2146, 4294901760
    %2148 = vmatpush1.msra.mxu0 %v2147
    %2149 = vmatprep.subr.mxu0 0.0
    %v2150 = vand.u32 %v1938, 4294901760
    %v2151 = vsub.f32 %v1938, %v2150
    %v2152 = vand.u32 %v2151, 4294901760
    %v2153 = vsub.f32 %v2151, %v2152
    %v2154 = vand.u32 %v2153, 4294901760
    %2155 = vmatpush1.msra.mxu0 %v2154
    %2156 = vmatprep.subr.mxu0 0.0
    %v2157 = vand.u32 %v1939, 4294901760
    %v2158 = vsub.f32 %v1939, %v2157
    %v2159 = vand.u32 %v2158, 4294901760
    %v2160 = vsub.f32 %v2158, %v2159
    %v2161 = vand.u32 %v2160, 4294901760
    %2162 = vmatpush1.msra.mxu0 %v2161
    %2163 = vmatprep.subr.mxu0 0.0
    %v2164 = vand.u32 %v1940, 4294901760
    %v2165 = vsub.f32 %v1940, %v2164
    %v2166 = vand.u32 %v2165, 4294901760
    %v2167 = vsub.f32 %v2165, %v2166
    %v2168 = vand.u32 %v2167, 4294901760
    %2169 = vmatpush1.msra.mxu0 %v2168
    %2170 = vmatprep.subr.mxu0 0.0
    %v2171 = vand.u32 %v1941, 4294901760
    %v2172 = vsub.f32 %v1941, %v2171
    %v2173 = vand.u32 %v2172, 4294901760
    %v2174 = vsub.f32 %v2172, %v2173
    %v2175 = vand.u32 %v2174, 4294901760
    %2176 = vmatpush1.msra.mxu0 %v2175
    %2177 = vmatprep.subr.mxu0 0.0
    %v2178 = vand.u32 %v1942, 4294901760
    %v2179 = vsub.f32 %v1942, %v2178
    %v2180 = vand.u32 %v2179, 4294901760
    %v2181 = vsub.f32 %v2179, %v2180
    %v2182 = vand.u32 %v2181, 4294901760
    %2183 = vmatpush1.msra.mxu0 %v2182
    %2184 = vmatprep.subr.mxu0 0.0
    %v2185 = vand.u32 %v1943, 4294901760
    %v2186 = vsub.f32 %v1943, %v2185
    %v2187 = vand.u32 %v2186, 4294901760
    %v2188 = vsub.f32 %v2186, %v2187
    %v2189 = vand.u32 %v2188, 4294901760
    %2190 = vmatpush1.msra.mxu0 %v2189
    %2191 = vmatprep.subr.mxu0 0.0
    %v2192 = vand.u32 %v1944, 4294901760
    %v2193 = vsub.f32 %v1944, %v2192
    %v2194 = vand.u32 %v2193, 4294901760
    %v2195 = vsub.f32 %v2193, %v2194
    %v2196 = vand.u32 %v2195, 4294901760
    %2197 = vmatpush1.msra.mxu0 %v2196
    %2198 = vmatprep.subr.mxu0 0.0
    %v2199 = vand.u32 %v1945, 4294901760
    %v2200 = vsub.f32 %v1945, %v2199
    %v2201 = vand.u32 %v2200, 4294901760
    %v2202 = vsub.f32 %v2200, %v2201
    %v2203 = vand.u32 %v2202, 4294901760
    %2204 = vmatpush1.msra.mxu0 %v2203
    %2205 = vmatprep.subr.mxu0 0.0
    %v2206 = vand.u32 %v1946, 4294901760
    %v2207 = vsub.f32 %v1946, %v2206
    %v2208 = vand.u32 %v2207, 4294901760
    %v2209 = vsub.f32 %v2207, %v2208
    %v2210 = vand.u32 %v2209, 4294901760
    %2211 = vmatpush1.msra.mxu0 %v2210
    %2212 = vmatprep.subr.mxu0 0.0
    %v2213 = vand.u32 %v1947, 4294901760
    %v2214 = vsub.f32 %v1947, %v2213
    %v2215 = vand.u32 %v2214, 4294901760
    %v2216 = vsub.f32 %v2214, %v2215
    %v2217 = vand.u32 %v2216, 4294901760
    %2218 = vmatpush1.msra.mxu0 %v2217
    %2219 = vmatprep.subr.mxu0 0.0
    %v2220 = vand.u32 %v1948, 4294901760
    %v2221 = vsub.f32 %v1948, %v2220
    %v2222 = vand.u32 %v2221, 4294901760
    %v2223 = vsub.f32 %v2221, %v2222
    %v2224 = vand.u32 %v2223, 4294901760
    %2225 = vmatpush1.msra.mxu0 %v2224
    %2226 = vmatprep.subr.mxu0 0.0
    %v2227 = vand.u32 %v1949, 4294901760
    %v2228 = vsub.f32 %v1949, %v2227
    %v2229 = vand.u32 %v2228, 4294901760
    %v2230 = vsub.f32 %v2228, %v2229
    %v2231 = vand.u32 %v2230, 4294901760
    %2232 = vmatpush1.msra.mxu0 %v2231
    %2233 = vmatprep.subr.mxu0 0.0
    %v2234 = vand.u32 %v1950, 4294901760
    %v2235 = vsub.f32 %v1950, %v2234
    %v2236 = vand.u32 %v2235, 4294901760
    %v2237 = vsub.f32 %v2235, %v2236
    %v2238 = vand.u32 %v2237, 4294901760
    %2239 = vmatpush1.msra.mxu0 %v2238
    %2240 = vmatprep.subr.mxu0 0.0
    %v2241 = vand.u32 %v1951, 4294901760
    %v2242 = vsub.f32 %v1951, %v2241
    %v2243 = vand.u32 %v2242, 4294901760
    %v2244 = vsub.f32 %v2242, %v2243
    %v2245 = vand.u32 %v2244, 4294901760
    %2246 = vmatpush1.msra.mxu0 %v2245
    %2247 = vmatprep.subr.mxu0 0.0
    %v2248 = vand.u32 %v1952, 4294901760
    %v2249 = vsub.f32 %v1952, %v2248
    %v2250 = vand.u32 %v2249, 4294901760
    %v2251 = vsub.f32 %v2249, %v2250
    %v2252 = vand.u32 %v2251, 4294901760
    %2253 = vmatpush1.msra.mxu0 %v2252
    %2254 = vmatprep.subr.mxu0 0.0
    %v2255 = vand.u32 %v1953, 4294901760
    %v2256 = vsub.f32 %v1953, %v2255
    %v2257 = vand.u32 %v2256, 4294901760
    %v2258 = vsub.f32 %v2256, %v2257
    %v2259 = vand.u32 %v2258, 4294901760
    %2260 = vmatpush1.msra.mxu0 %v2259
    %2261 = vmatprep.subr.mxu0 0.0
    %v2262 = vand.u32 %v1954, 4294901760
    %v2263 = vsub.f32 %v1954, %v2262
    %v2264 = vand.u32 %v2263, 4294901760
    %v2265 = vsub.f32 %v2263, %v2264
    %v2266 = vand.u32 %v2265, 4294901760
    %2267 = vmatpush1.msra.mxu0 %v2266
    %2268 = vmatprep.subr.mxu0 0.0
    %v2269 = vand.u32 %v1955, 4294901760
    %v2270 = vsub.f32 %v1955, %v2269
    %v2271 = vand.u32 %v2270, 4294901760
    %v2272 = vsub.f32 %v2270, %v2271
    %v2273 = vand.u32 %v2272, 4294901760
    %2274 = vmatpush1.msra.mxu0 %v2273
    %2275 = vmatprep.subr.mxu0 0.0
    %v2276 = vand.u32 %v1956, 4294901760
    %v2277 = vsub.f32 %v1956, %v2276
    %v2278 = vand.u32 %v2277, 4294901760
    %v2279 = vsub.f32 %v2277, %v2278
    %v2280 = vand.u32 %v2279, 4294901760
    %2281 = vmatpush1.msra.mxu0 %v2280
    %2282 = vmatprep.subr.mxu0 0.0
    %v2283 = vand.u32 %v1957, 4294901760
    %v2284 = vsub.f32 %v1957, %v2283
    %v2285 = vand.u32 %v2284, 4294901760
    %v2286 = vsub.f32 %v2284, %v2285
    %v2287 = vand.u32 %v2286, 4294901760
    %2288 = vmatpush1.msra.mxu0 %v2287
    %2289 = vmatprep.subr.mxu0 0.0
    %v2290 = vand.u32 %v1958, 4294901760
    %v2291 = vsub.f32 %v1958, %v2290
    %v2292 = vand.u32 %v2291, 4294901760
    %v2293 = vsub.f32 %v2291, %v2292
    %v2294 = vand.u32 %v2293, 4294901760
    %2295 = vmatpush1.msra.mxu0 %v2294
    %2296 = vmatprep.subr.mxu0 0.0
    %v2297 = vand.u32 %v1959, 4294901760
    %v2298 = vsub.f32 %v1959, %v2297
    %v2299 = vand.u32 %v2298, 4294901760
    %v2300 = vsub.f32 %v2298, %v2299
    %v2301 = vand.u32 %v2300, 4294901760
    %2302 = vmatpush1.msra.mxu0 %v2301
    %v2303 = vand.u32 %v1927, 4294901760
    %2304 = vmatprep.mubr.f32.mxu0 %v2303
    %v2305 = vand.u32 %v1926, 4294901760
    %2306 = vmatmul.mubr.f32.gmra.mrb[0].mxu0 %v2305
    %v2307 = vpop.f32.mrb[0].mxu0
    %v2308 = vadd.f32 %v2076, %v2307
    %v2309 = vpop.f32.mrb[0].mxu0
    %2310 = vdwg.mxu0
    %2311 = vmatprep.subr.mxu0 0.0
    %v2312 = vand.u32 %v1928, 4294901760
    %v2313 = vsub.f32 %v1928, %v2312
    %2314 = vmatpush1.msra.mxu0 %v2313
    %2315 = vmatprep.subr.mxu0 0.0
    %v2316 = vand.u32 %v1929, 4294901760
    %v2317 = vsub.f32 %v1929, %v2316
    %2318 = vmatpush1.msra.mxu0 %v2317
    %2319 = vmatprep.subr.mxu0 0.0
    %v2320 = vand.u32 %v1930, 4294901760
    %v2321 = vsub.f32 %v1930, %v2320
    %2322 = vmatpush1.msra.mxu0 %v2321
    %2323 = vmatprep.subr.mxu0 0.0
    %v2324 = vand.u32 %v1931, 4294901760
    %v2325 = vsub.f32 %v1931, %v2324
    %2326 = vmatpush1.msra.mxu0 %v2325
    %2327 = vmatprep.subr.mxu0 0.0
    %v2328 = vand.u32 %v1932, 4294901760
    %v2329 = vsub.f32 %v1932, %v2328
    %2330 = vmatpush1.msra.mxu0 %v2329
    %2331 = vmatprep.subr.mxu0 0.0
    %v2332 = vand.u32 %v1933, 4294901760
    %v2333 = vsub.f32 %v1933, %v2332
    %2334 = vmatpush1.msra.mxu0 %v2333
    %2335 = vmatprep.subr.mxu0 0.0
    %v2336 = vand.u32 %v1934, 4294901760
    %v2337 = vsub.f32 %v1934, %v2336
    %2338 = vmatpush1.msra.mxu0 %v2337
    %2339 = vmatprep.subr.mxu0 0.0
    %v2340 = vand.u32 %v1935, 4294901760
    %v2341 = vsub.f32 %v1935, %v2340
    %2342 = vmatpush1.msra.mxu0 %v2341
    %2343 = vmatprep.subr.mxu0 0.0
    %v2344 = vand.u32 %v1936, 4294901760
    %v2345 = vsub.f32 %v1936, %v2344
    %2346 = vmatpush1.msra.mxu0 %v2345
    %2347 = vmatprep.subr.mxu0 0.0
    %v2348 = vand.u32 %v1937, 4294901760
    %v2349 = vsub.f32 %v1937, %v2348
    %2350 = vmatpush1.msra.mxu0 %v2349
    %2351 = vmatprep.subr.mxu0 0.0
    %v2352 = vand.u32 %v1938, 4294901760
    %v2353 = vsub.f32 %v1938, %v2352
    %2354 = vmatpush1.msra.mxu0 %v2353
    %2355 = vmatprep.subr.mxu0 0.0
    %v2356 = vand.u32 %v1939, 4294901760
    %v2357 = vsub.f32 %v1939, %v2356
    %2358 = vmatpush1.msra.mxu0 %v2357
    %2359 = vmatprep.subr.mxu0 0.0
    %v2360 = vand.u32 %v1940, 4294901760
    %v2361 = vsub.f32 %v1940, %v2360
    %2362 = vmatpush1.msra.mxu0 %v2361
    %2363 = vmatprep.subr.mxu0 0.0
    %v2364 = vand.u32 %v1941, 4294901760
    %v2365 = vsub.f32 %v1941, %v2364
    %2366 = vmatpush1.msra.mxu0 %v2365
    %2367 = vmatprep.subr.mxu0 0.0
    %v2368 = vand.u32 %v1942, 4294901760
    %v2369 = vsub.f32 %v1942, %v2368
    %2370 = vmatpush1.msra.mxu0 %v2369
    %2371 = vmatprep.subr.mxu0 0.0
    %v2372 = vand.u32 %v1943, 4294901760
    %v2373 = vsub.f32 %v1943, %v2372
    %2374 = vmatpush1.msra.mxu0 %v2373
    %2375 = vmatprep.subr.mxu0 0.0
    %v2376 = vand.u32 %v1944, 4294901760
    %v2377 = vsub.f32 %v1944, %v2376
    %2378 = vmatpush1.msra.mxu0 %v2377
    %2379 = vmatprep.subr.mxu0 0.0
    %v2380 = vand.u32 %v1945, 4294901760
    %v2381 = vsub.f32 %v1945, %v2380
    %2382 = vmatpush1.msra.mxu0 %v2381
    %2383 = vmatprep.subr.mxu0 0.0
    %v2384 = vand.u32 %v1946, 4294901760
    %v2385 = vsub.f32 %v1946, %v2384
    %2386 = vmatpush1.msra.mxu0 %v2385
    %2387 = vmatprep.subr.mxu0 0.0
    %v2388 = vand.u32 %v1947, 4294901760
    %v2389 = vsub.f32 %v1947, %v2388
    %2390 = vmatpush1.msra.mxu0 %v2389
    %2391 = vmatprep.subr.mxu0 0.0
    %v2392 = vand.u32 %v1948, 4294901760
    %v2393 = vsub.f32 %v1948, %v2392
    %2394 = vmatpush1.msra.mxu0 %v2393
    %2395 = vmatprep.subr.mxu0 0.0
    %v2396 = vand.u32 %v1949, 4294901760
    %v2397 = vsub.f32 %v1949, %v2396
    %2398 = vmatpush1.msra.mxu0 %v2397
    %2399 = vmatprep.subr.mxu0 0.0
    %v2400 = vand.u32 %v1950, 4294901760
    %v2401 = vsub.f32 %v1950, %v2400
    %2402 = vmatpush1.msra.mxu0 %v2401
    %2403 = vmatprep.subr.mxu0 0.0
    %v2404 = vand.u32 %v1951, 4294901760
    %v2405 = vsub.f32 %v1951, %v2404
    %2406 = vmatpush1.msra.mxu0 %v2405
    %2407 = vmatprep.subr.mxu0 0.0
    %v2408 = vand.u32 %v1952, 4294901760
    %v2409 = vsub.f32 %v1952, %v2408
    %2410 = vmatpush1.msra.mxu0 %v2409
    %2411 = vmatprep.subr.mxu0 0.0
    %v2412 = vand.u32 %v1953, 4294901760
    %v2413 = vsub.f32 %v1953, %v2412
    %2414 = vmatpush1.msra.mxu0 %v2413
    %2415 = vmatprep.subr.mxu0 0.0
    %v2416 = vand.u32 %v1954, 4294901760
    %v2417 = vsub.f32 %v1954, %v2416
    %2418 = vmatpush1.msra.mxu0 %v2417
    %2419 = vmatprep.subr.mxu0 0.0
    %v2420 = vand.u32 %v1955, 4294901760
    %v2421 = vsub.f32 %v1955, %v2420
    %2422 = vmatpush1.msra.mxu0 %v2421
    %2423 = vmatprep.subr.mxu0 0.0
    %v2424 = vand.u32 %v1956, 4294901760
    %v2425 = vsub.f32 %v1956, %v2424
    %2426 = vmatpush1.msra.mxu0 %v2425
    %2427 = vmatprep.subr.mxu0 0.0
    %v2428 = vand.u32 %v1957, 4294901760
    %v2429 = vsub.f32 %v1957, %v2428
    %2430 = vmatpush1.msra.mxu0 %v2429
    %2431 = vmatprep.subr.mxu0 0.0
    %v2432 = vand.u32 %v1958, 4294901760
    %v2433 = vsub.f32 %v1958, %v2432
    %2434 = vmatpush1.msra.mxu0 %v2433
    %2435 = vmatprep.subr.mxu0 0.0
    %v2436 = vand.u32 %v1959, 4294901760
    %v2437 = vsub.f32 %v1959, %v2436
    %2438 = vmatpush1.msra.mxu0 %v2437
    %v2439 = vand.u32 %v1927, 4294901760
    %v2440 = vsub.f32 %v1927, %v2439
    %2441 = vmatprep.mubr.f32.mxu0 %v2440
    %v2442 = vand.u32 %v1926, 4294901760
    %v2443 = vsub.f32 %v1926, %v2442
    %2444 = vmatmul.mubr.f32.gmra.mrb[0].mxu0 %v2443
    %v2445 = vpop.f32.mrb[0].mxu0
    %v2446 = vadd.f32 %v2308, %v2445
    %v2447 = vpop.f32.mrb[0].mxu0
    %2448 = vdwg.mxu0
    %2449 = vmatprep.subr.mxu0 0.0
    %v2450 = vand.u32 %v1928, 4294901760
    %2451 = vmatpush1.msra.mxu0 %v2450
    %2452 = vmatprep.subr.mxu0 0.0
    %v2453 = vand.u32 %v1929, 4294901760
    %2454 = vmatpush1.msra.mxu0 %v2453
    %2455 = vmatprep.subr.mxu0 0.0
    %v2456 = vand.u32 %v1930, 4294901760
    %2457 = vmatpush1.msra.mxu0 %v2456
    %2458 = vmatprep.subr.mxu0 0.0
    %v2459 = vand.u32 %v1931, 4294901760
    %2460 = vmatpush1.msra.mxu0 %v2459
    %2461 = vmatprep.subr.mxu0 0.0
    %v2462 = vand.u32 %v1932, 4294901760
    %2463 = vmatpush1.msra.mxu0 %v2462
    %2464 = vmatprep.subr.mxu0 0.0
    %v2465 = vand.u32 %v1933, 4294901760
    %2466 = vmatpush1.msra.mxu0 %v2465
    %2467 = vmatprep.subr.mxu0 0.0
    %v2468 = vand.u32 %v1934, 4294901760
    %2469 = vmatpush1.msra.mxu0 %v2468
    %2470 = vmatprep.subr.mxu0 0.0
    %v2471 = vand.u32 %v1935, 4294901760
    %2472 = vmatpush1.msra.mxu0 %v2471
    %2473 = vmatprep.subr.mxu0 0.0
    %v2474 = vand.u32 %v1936, 4294901760
    %2475 = vmatpush1.msra.mxu0 %v2474
    %2476 = vmatprep.subr.mxu0 0.0
    %v2477 = vand.u32 %v1937, 4294901760
    %2478 = vmatpush1.msra.mxu0 %v2477
    %2479 = vmatprep.subr.mxu0 0.0
    %v2480 = vand.u32 %v1938, 4294901760
    %2481 = vmatpush1.msra.mxu0 %v2480
    %2482 = vmatprep.subr.mxu0 0.0
    %v2483 = vand.u32 %v1939, 4294901760
    %2484 = vmatpush1.msra.mxu0 %v2483
    %2485 = vmatprep.subr.mxu0 0.0
    %v2486 = vand.u32 %v1940, 4294901760
    %2487 = vmatpush1.msra.mxu0 %v2486
    %2488 = vmatprep.subr.mxu0 0.0
    %v2489 = vand.u32 %v1941, 4294901760
    %2490 = vmatpush1.msra.mxu0 %v2489
    %2491 = vmatprep.subr.mxu0 0.0
    %v2492 = vand.u32 %v1942, 4294901760
    %2493 = vmatpush1.msra.mxu0 %v2492
    %2494 = vmatprep.subr.mxu0 0.0
    %v2495 = vand.u32 %v1943, 4294901760
    %2496 = vmatpush1.msra.mxu0 %v2495
    %2497 = vmatprep.subr.mxu0 0.0
    %v2498 = vand.u32 %v1944, 4294901760
    %2499 = vmatpush1.msra.mxu0 %v2498
    %2500 = vmatprep.subr.mxu0 0.0
    %v2501 = vand.u32 %v1945, 4294901760
    %2502 = vmatpush1.msra.mxu0 %v2501
    %2503 = vmatprep.subr.mxu0 0.0
    %v2504 = vand.u32 %v1946, 4294901760
    %2505 = vmatpush1.msra.mxu0 %v2504
    %2506 = vmatprep.subr.mxu0 0.0
    %v2507 = vand.u32 %v1947, 4294901760
    %2508 = vmatpush1.msra.mxu0 %v2507
    %2509 = vmatprep.subr.mxu0 0.0
    %v2510 = vand.u32 %v1948, 4294901760
    %2511 = vmatpush1.msra.mxu0 %v2510
    %2512 = vmatprep.subr.mxu0 0.0
    %v2513 = vand.u32 %v1949, 4294901760
    %2514 = vmatpush1.msra.mxu0 %v2513
    %2515 = vmatprep.subr.mxu0 0.0
    %v2516 = vand.u32 %v1950, 4294901760
    %2517 = vmatpush1.msra.mxu0 %v2516
    %2518 = vmatprep.subr.mxu0 0.0
    %v2519 = vand.u32 %v1951, 4294901760
    %2520 = vmatpush1.msra.mxu0 %v2519
    %2521 = vmatprep.subr.mxu0 0.0
    %v2522 = vand.u32 %v1952, 4294901760
    %2523 = vmatpush1.msra.mxu0 %v2522
    %2524 = vmatprep.subr.mxu0 0.0
    %v2525 = vand.u32 %v1953, 4294901760
    %2526 = vmatpush1.msra.mxu0 %v2525
    %2527 = vmatprep.subr.mxu0 0.0
    %v2528 = vand.u32 %v1954, 4294901760
    %2529 = vmatpush1.msra.mxu0 %v2528
    %2530 = vmatprep.subr.mxu0 0.0
    %v2531 = vand.u32 %v1955, 4294901760
    %2532 = vmatpush1.msra.mxu0 %v2531
    %2533 = vmatprep.subr.mxu0 0.0
    %v2534 = vand.u32 %v1956, 4294901760
    %2535 = vmatpush1.msra.mxu0 %v2534
    %2536 = vmatprep.subr.mxu0 0.0
    %v2537 = vand.u32 %v1957, 4294901760
    %2538 = vmatpush1.msra.mxu0 %v2537
    %2539 = vmatprep.subr.mxu0 0.0
    %v2540 = vand.u32 %v1958, 4294901760
    %2541 = vmatpush1.msra.mxu0 %v2540
    %2542 = vmatprep.subr.mxu0 0.0
    %v2543 = vand.u32 %v1959, 4294901760
    %2544 = vmatpush1.msra.mxu0 %v2543
    %v2545 = vand.u32 %v1927, 4294901760
    %v2546 = vsub.f32 %v1927, %v2545
    %v2547 = vand.u32 %v2546, 4294901760
    %2548 = vmatprep.mubr.f32.mxu0 %v2547
    %v2549 = vand.u32 %v1926, 4294901760
    %v2550 = vsub.f32 %v1926, %v2549
    %v2551 = vand.u32 %v2550, 4294901760
    %2552 = vmatmul.mubr.f32.gmra.mrb[0].mxu0 %v2551
    %v2553 = vpop.f32.mrb[0].mxu0
    %v2554 = vadd.f32 %v2446, %v2553
    %v2555 = vpop.f32.mrb[0].mxu0
    %2556 = vdwg.mxu0
    %2557 = vmatprep.subr.mxu0 0.0
    %v2558 = vand.u32 %v1928, 4294901760
    %v2559 = vsub.f32 %v1928, %v2558
    %v2560 = vand.u32 %v2559, 4294901760
    %2561 = vmatpush1.msra.mxu0 %v2560
    %2562 = vmatprep.subr.mxu0 0.0
    %v2563 = vand.u32 %v1929, 4294901760
    %v2564 = vsub.f32 %v1929, %v2563
    %v2565 = vand.u32 %v2564, 4294901760
    %2566 = vmatpush1.msra.mxu0 %v2565
    %2567 = vmatprep.subr.mxu0 0.0
    %v2568 = vand.u32 %v1930, 4294901760
    %v2569 = vsub.f32 %v1930, %v2568
    %v2570 = vand.u32 %v2569, 4294901760
    %2571 = vmatpush1.msra.mxu0 %v2570
    %2572 = vmatprep.subr.mxu0 0.0
    %v2573 = vand.u32 %v1931, 4294901760
    %v2574 = vsub.f32 %v1931, %v2573
    %v2575 = vand.u32 %v2574, 4294901760
    %2576 = vmatpush1.msra.mxu0 %v2575
    %2577 = vmatprep.subr.mxu0 0.0
    %v2578 = vand.u32 %v1932, 4294901760
    %v2579 = vsub.f32 %v1932, %v2578
    %v2580 = vand.u32 %v2579, 4294901760
    %2581 = vmatpush1.msra.mxu0 %v2580
    %2582 = vmatprep.subr.mxu0 0.0
    %v2583 = vand.u32 %v1933, 4294901760
    %v2584 = vsub.f32 %v1933, %v2583
    %v2585 = vand.u32 %v2584, 4294901760
    %2586 = vmatpush1.msra.mxu0 %v2585
    %2587 = vmatprep.subr.mxu0 0.0
    %v2588 = vand.u32 %v1934, 4294901760
    %v2589 = vsub.f32 %v1934, %v2588
    %v2590 = vand.u32 %v2589, 4294901760
    %2591 = vmatpush1.msra.mxu0 %v2590
    %2592 = vmatprep.subr.mxu0 0.0
    %v2593 = vand.u32 %v1935, 4294901760
    %v2594 = vsub.f32 %v1935, %v2593
    %v2595 = vand.u32 %v2594, 4294901760
    %2596 = vmatpush1.msra.mxu0 %v2595
    %2597 = vmatprep.subr.mxu0 0.0
    %v2598 = vand.u32 %v1936, 4294901760
    %v2599 = vsub.f32 %v1936, %v2598
    %v2600 = vand.u32 %v2599, 4294901760
    %2601 = vmatpush1.msra.mxu0 %v2600
    %2602 = vmatprep.subr.mxu0 0.0
    %v2603 = vand.u32 %v1937, 4294901760
    %v2604 = vsub.f32 %v1937, %v2603
    %v2605 = vand.u32 %v2604, 4294901760
    %2606 = vmatpush1.msra.mxu0 %v2605
    %2607 = vmatprep.subr.mxu0 0.0
    %v2608 = vand.u32 %v1938, 4294901760
    %v2609 = vsub.f32 %v1938, %v2608
    %v2610 = vand.u32 %v2609, 4294901760
    %2611 = vmatpush1.msra.mxu0 %v2610
    %2612 = vmatprep.subr.mxu0 0.0
    %v2613 = vand.u32 %v1939, 4294901760
    %v2614 = vsub.f32 %v1939, %v2613
    %v2615 = vand.u32 %v2614, 4294901760
    %2616 = vmatpush1.msra.mxu0 %v2615
    %2617 = vmatprep.subr.mxu0 0.0
    %v2618 = vand.u32 %v1940, 4294901760
    %v2619 = vsub.f32 %v1940, %v2618
    %v2620 = vand.u32 %v2619, 4294901760
    %2621 = vmatpush1.msra.mxu0 %v2620
    %2622 = vmatprep.subr.mxu0 0.0
    %v2623 = vand.u32 %v1941, 4294901760
    %v2624 = vsub.f32 %v1941, %v2623
    %v2625 = vand.u32 %v2624, 4294901760
    %2626 = vmatpush1.msra.mxu0 %v2625
    %2627 = vmatprep.subr.mxu0 0.0
    %v2628 = vand.u32 %v1942, 4294901760
    %v2629 = vsub.f32 %v1942, %v2628
    %v2630 = vand.u32 %v2629, 4294901760
    %2631 = vmatpush1.msra.mxu0 %v2630
    %2632 = vmatprep.subr.mxu0 0.0
    %v2633 = vand.u32 %v1943, 4294901760
    %v2634 = vsub.f32 %v1943, %v2633
    %v2635 = vand.u32 %v2634, 4294901760
    %2636 = vmatpush1.msra.mxu0 %v2635
    %2637 = vmatprep.subr.mxu0 0.0
    %v2638 = vand.u32 %v1944, 4294901760
    %v2639 = vsub.f32 %v1944, %v2638
    %v2640 = vand.u32 %v2639, 4294901760
    %2641 = vmatpush1.msra.mxu0 %v2640
    %2642 = vmatprep.subr.mxu0 0.0
    %v2643 = vand.u32 %v1945, 4294901760
    %v2644 = vsub.f32 %v1945, %v2643
    %v2645 = vand.u32 %v2644, 4294901760
    %2646 = vmatpush1.msra.mxu0 %v2645
    %2647 = vmatprep.subr.mxu0 0.0
    %v2648 = vand.u32 %v1946, 4294901760
    %v2649 = vsub.f32 %v1946, %v2648
    %v2650 = vand.u32 %v2649, 4294901760
    %2651 = vmatpush1.msra.mxu0 %v2650
    %2652 = vmatprep.subr.mxu0 0.0
    %v2653 = vand.u32 %v1947, 4294901760
    %v2654 = vsub.f32 %v1947, %v2653
    %v2655 = vand.u32 %v2654, 4294901760
    %2656 = vmatpush1.msra.mxu0 %v2655
    %2657 = vmatprep.subr.mxu0 0.0
    %v2658 = vand.u32 %v1948, 4294901760
    %v2659 = vsub.f32 %v1948, %v2658
    %v2660 = vand.u32 %v2659, 4294901760
    %2661 = vmatpush1.msra.mxu0 %v2660
    %2662 = vmatprep.subr.mxu0 0.0
    %v2663 = vand.u32 %v1949, 4294901760
    %v2664 = vsub.f32 %v1949, %v2663
    %v2665 = vand.u32 %v2664, 4294901760
    %2666 = vmatpush1.msra.mxu0 %v2665
    %2667 = vmatprep.subr.mxu0 0.0
    %v2668 = vand.u32 %v1950, 4294901760
    %v2669 = vsub.f32 %v1950, %v2668
    %v2670 = vand.u32 %v2669, 4294901760
    %2671 = vmatpush1.msra.mxu0 %v2670
    %2672 = vmatprep.subr.mxu0 0.0
    %v2673 = vand.u32 %v1951, 4294901760
    %v2674 = vsub.f32 %v1951, %v2673
    %v2675 = vand.u32 %v2674, 4294901760
    %2676 = vmatpush1.msra.mxu0 %v2675
    %2677 = vmatprep.subr.mxu0 0.0
    %v2678 = vand.u32 %v1952, 4294901760
    %v2679 = vsub.f32 %v1952, %v2678
    %v2680 = vand.u32 %v2679, 4294901760
    %2681 = vmatpush1.msra.mxu0 %v2680
    %2682 = vmatprep.subr.mxu0 0.0
    %v2683 = vand.u32 %v1953, 4294901760
    %v2684 = vsub.f32 %v1953, %v2683
    %v2685 = vand.u32 %v2684, 4294901760
    %2686 = vmatpush1.msra.mxu0 %v2685
    %2687 = vmatprep.subr.mxu0 0.0
    %v2688 = vand.u32 %v1954, 4294901760
    %v2689 = vsub.f32 %v1954, %v2688
    %v2690 = vand.u32 %v2689, 4294901760
    %2691 = vmatpush1.msra.mxu0 %v2690
    %2692 = vmatprep.subr.mxu0 0.0
    %v2693 = vand.u32 %v1955, 4294901760
    %v2694 = vsub.f32 %v1955, %v2693
    %v2695 = vand.u32 %v2694, 4294901760
    %2696 = vmatpush1.msra.mxu0 %v2695
    %2697 = vmatprep.subr.mxu0 0.0
    %v2698 = vand.u32 %v1956, 4294901760
    %v2699 = vsub.f32 %v1956, %v2698
    %v2700 = vand.u32 %v2699, 4294901760
    %2701 = vmatpush1.msra.mxu0 %v2700
    %2702 = vmatprep.subr.mxu0 0.0
    %v2703 = vand.u32 %v1957, 4294901760
    %v2704 = vsub.f32 %v1957, %v2703
    %v2705 = vand.u32 %v2704, 4294901760
    %2706 = vmatpush1.msra.mxu0 %v2705
    %2707 = vmatprep.subr.mxu0 0.0
    %v2708 = vand.u32 %v1958, 4294901760
    %v2709 = vsub.f32 %v1958, %v2708
    %v2710 = vand.u32 %v2709, 4294901760
    %2711 = vmatpush1.msra.mxu0 %v2710
    %2712 = vmatprep.subr.mxu0 0.0
    %v2713 = vand.u32 %v1959, 4294901760
    %v2714 = vsub.f32 %v1959, %v2713
    %v2715 = vand.u32 %v2714, 4294901760
    %2716 = vmatpush1.msra.mxu0 %v2715
    %v2717 = vand.u32 %v1927, 4294901760
    %2718 = vmatprep.mubr.f32.mxu0 %v2717
    %v2719 = vand.u32 %v1926, 4294901760
    %2720 = vmatmul.mubr.f32.gmra.mrb[0].mxu0 %v2719
    %v2721 = vpop.f32.mrb[0].mxu0
    %v2722 = vadd.f32 %v2554, %v2721
    %v2723 = vpop.f32.mrb[0].mxu0
    %2724 = vdwg.mxu0
    %2725 = vmatprep.subr.mxu0 0.0
    %v2726 = vand.u32 %v1928, 4294901760
    %2727 = vmatpush1.msra.mxu0 %v2726
    %2728 = vmatprep.subr.mxu0 0.0
    %v2729 = vand.u32 %v1929, 4294901760
    %2730 = vmatpush1.msra.mxu0 %v2729
    %2731 = vmatprep.subr.mxu0 0.0
    %v2732 = vand.u32 %v1930, 4294901760
    %2733 = vmatpush1.msra.mxu0 %v2732
    %2734 = vmatprep.subr.mxu0 0.0
    %v2735 = vand.u32 %v1931, 4294901760
    %2736 = vmatpush1.msra.mxu0 %v2735
    %2737 = vmatprep.subr.mxu0 0.0
    %v2738 = vand.u32 %v1932, 4294901760
    %2739 = vmatpush1.msra.mxu0 %v2738
    %2740 = vmatprep.subr.mxu0 0.0
    %v2741 = vand.u32 %v1933, 4294901760
    %2742 = vmatpush1.msra.mxu0 %v2741
    %2743 = vmatprep.subr.mxu0 0.0
    %v2744 = vand.u32 %v1934, 4294901760
    %2745 = vmatpush1.msra.mxu0 %v2744
    %2746 = vmatprep.subr.mxu0 0.0
    %v2747 = vand.u32 %v1935, 4294901760
    %2748 = vmatpush1.msra.mxu0 %v2747
    %2749 = vmatprep.subr.mxu0 0.0
    %v2750 = vand.u32 %v1936, 4294901760
    %2751 = vmatpush1.msra.mxu0 %v2750
    %2752 = vmatprep.subr.mxu0 0.0
    %v2753 = vand.u32 %v1937, 4294901760
    %2754 = vmatpush1.msra.mxu0 %v2753
    %2755 = vmatprep.subr.mxu0 0.0
    %v2756 = vand.u32 %v1938, 4294901760
    %2757 = vmatpush1.msra.mxu0 %v2756
    %2758 = vmatprep.subr.mxu0 0.0
    %v2759 = vand.u32 %v1939, 4294901760
    %2760 = vmatpush1.msra.mxu0 %v2759
    %2761 = vmatprep.subr.mxu0 0.0
    %v2762 = vand.u32 %v1940, 4294901760
    %2763 = vmatpush1.msra.mxu0 %v2762
    %2764 = vmatprep.subr.mxu0 0.0
    %v2765 = vand.u32 %v1941, 4294901760
    %2766 = vmatpush1.msra.mxu0 %v2765
    %2767 = vmatprep.subr.mxu0 0.0
    %v2768 = vand.u32 %v1942, 4294901760
    %2769 = vmatpush1.msra.mxu0 %v2768
    %2770 = vmatprep.subr.mxu0 0.0
    %v2771 = vand.u32 %v1943, 4294901760
    %2772 = vmatpush1.msra.mxu0 %v2771
    %2773 = vmatprep.subr.mxu0 0.0
    %v2774 = vand.u32 %v1944, 4294901760
    %2775 = vmatpush1.msra.mxu0 %v2774
    %2776 = vmatprep.subr.mxu0 0.0
    %v2777 = vand.u32 %v1945, 4294901760
    %2778 = vmatpush1.msra.mxu0 %v2777
    %2779 = vmatprep.subr.mxu0 0.0
    %v2780 = vand.u32 %v1946, 4294901760
    %2781 = vmatpush1.msra.mxu0 %v2780
    %2782 = vmatprep.subr.mxu0 0.0
    %v2783 = vand.u32 %v1947, 4294901760
    %2784 = vmatpush1.msra.mxu0 %v2783
    %2785 = vmatprep.subr.mxu0 0.0
    %v2786 = vand.u32 %v1948, 4294901760
    %2787 = vmatpush1.msra.mxu0 %v2786
    %2788 = vmatprep.subr.mxu0 0.0
    %v2789 = vand.u32 %v1949, 4294901760
    %2790 = vmatpush1.msra.mxu0 %v2789
    %2791 = vmatprep.subr.mxu0 0.0
    %v2792 = vand.u32 %v1950, 4294901760
    %2793 = vmatpush1.msra.mxu0 %v2792
    %2794 = vmatprep.subr.mxu0 0.0
    %v2795 = vand.u32 %v1951, 4294901760
    %2796 = vmatpush1.msra.mxu0 %v2795
    %2797 = vmatprep.subr.mxu0 0.0
    %v2798 = vand.u32 %v1952, 4294901760
    %2799 = vmatpush1.msra.mxu0 %v2798
    %2800 = vmatprep.subr.mxu0 0.0
    %v2801 = vand.u32 %v1953, 4294901760
    %2802 = vmatpush1.msra.mxu0 %v2801
    %2803 = vmatprep.subr.mxu0 0.0
    %v2804 = vand.u32 %v1954, 4294901760
    %2805 = vmatpush1.msra.mxu0 %v2804
    %2806 = vmatprep.subr.mxu0 0.0
    %v2807 = vand.u32 %v1955, 4294901760
    %2808 = vmatpush1.msra.mxu0 %v2807
    %2809 = vmatprep.subr.mxu0 0.0
    %v2810 = vand.u32 %v1956, 4294901760
    %2811 = vmatpush1.msra.mxu0 %v2810
    %2812 = vmatprep.subr.mxu0 0.0
    %v2813 = vand.u32 %v1957, 4294901760
    %2814 = vmatpush1.msra.mxu0 %v2813
    %2815 = vmatprep.subr.mxu0 0.0
    %v2816 = vand.u32 %v1958, 4294901760
    %2817 = vmatpush1.msra.mxu0 %v2816
    %2818 = vmatprep.subr.mxu0 0.0
    %v2819 = vand.u32 %v1959, 4294901760
    %2820 = vmatpush1.msra.mxu0 %v2819
    %v2821 = vand.u32 %v1927, 4294901760
    %2822 = vmatprep.mubr.f32.mxu0 %v2821
    %v2823 = vand.u32 %v1926, 4294901760
    %2824 = vmatmul.mubr.f32.gmra.mrb[0].mxu0 %v2823
    %v2825 = vpop.f32.mrb[0].mxu0
    %v2826 = vadd.f32 %v2722, %v2825
    %v2827 = vpop.f32.mrb[0].mxu0
    %2828 = vdwg.mxu0
    %v2829 = vtanh.pop %v2826
    %2830 = vst [vmem:[#allocation10] sm:$0xff] %v2829
    // Predicated region
    $region46: #{actor_forward.1} parent=1 // pred_check
      _
    $region47: #{actor_forward.1} parent=1 // pred_check_branch
      %2832 = sbr.rel (0) target = $region49
    $region48: #{actor_forward.1} parent=1 // pred_region
      %s2834 = ssub.s32 128, 32
      %2835 = vsyncadd [#allocation4], %s2834
      %s2836 = sshll.u32 [#allocation10], 4
      %s2837 = int_to_ptr.vmem [resolvable:$true] %s2836
      %2842 = dma.vmem_to_hbm [thread:$0]  %s2837, 32, %s7, [#allocation4], 32, 32, 2
    $region49: #{actor_forward.1} parent=1 // pred_fallthru
      _
    // Predicated region
    $region50: #{actor_forward.1} parent=1 // pred_check
      _
    $region51: #{actor_forward.1} parent=1 // pred_check_branch
      %2844 = sbr.rel (0) target = $region53
    $region52: #{actor_forward.1} parent=1 // pred_region
      %2845 = dma.done [#allocation4], 128
    $region53: #{actor_forward.1} parent=1 // pred_fallthru
      _
    %2846 = vsyncpa [#allocation3], 1
    %2847 = vsyncpa [#allocation6], 1
    %2848 = vsyncpa [#allocation9], 1
    %2849 = vsyncpa [#allocation4], 1

</llo_original>
